<compile_context>
chip_gen: v6e
topology: v6e:2x2x1
jax: 0.10.0
libtpu: 0.0.40
codegen_flags: <defaults>
</compile_context>

<pallas_src>
import math
import functools

import jax
import jax.numpy as jnp
from jax import lax
from jax.experimental import pallas as pl
from jax.experimental.pallas import tpu as pltpu


def _round_up(x, m):
    return ((x + m - 1) // m) * m


# ---------------------------------------------------------------------------
# Tiled linear kernels:  (M, K) bf16 @ (K, N) bf16 -> (M, N) bf16
# ---------------------------------------------------------------------------
def _matmul_kernel(x_ref, w_ref, o_ref):
    # Full-K block: single MXU contraction, f32 accumulation, one bf16 store.
    o_ref[...] = jnp.dot(
        x_ref[...], w_ref[...], preferred_element_type=jnp.float32
    ).astype(o_ref.dtype)


def _matmul_kernel_ksplit(x_ref, w_ref, o_ref, acc_ref):
    @pl.when(pl.program_id(2) == 0)
    def _():
        acc_ref[...] = jnp.zeros_like(acc_ref)

    acc_ref[...] += jnp.dot(
        x_ref[...], w_ref[...], preferred_element_type=jnp.float32
    )

    @pl.when(pl.program_id(2) == pl.num_programs(2) - 1)
    def _():
        o_ref[...] = acc_ref[...].astype(o_ref.dtype)


def linear_bf16(x2d, w_kn):
    """x2d: (M, K) bf16, w_kn: (K, N) bf16 (pre-transposed). Returns (M, N) bf16."""
    M, K = x2d.shape
    Kw, N = w_kn.shape
    assert Kw == K

    # --- M tile (sublane dim); align 16 for bf16 sublane packing ---------------
    Mp16 = _round_up(M, 16)
    if Mp16 <= 512:
        tm, Mp = Mp16, Mp16
    elif Mp16 % 512 == 0:
        tm, Mp = 512, Mp16
    else:
        tm = next(t for t in range(512, 15, -16) if Mp16 % t == 0)
        if tm < 128:           # degenerate factorization: pad up instead
            tm, Mp = 512, _round_up(M, 512)
        else:
            Mp = Mp16

    # --- N tile (lane dim of output) -------------------------------------------
    Np = _round_up(N, 128)
    tn = next(t for t in (512, 384, 256, 128) if Np % t == 0)

    # --- K: keep whole when it fits so the reduction axis disappears -----------
    Kp = _round_up(K, 128)
    if Kp <= 2048:
        tk = Kp
    else:
        tk = next(t for t in (2048, 1024, 512, 384, 256, 128) if Kp % t == 0)

    # --- zero padding to tile multiples (mathematically inert) -----------------
    if (Mp, Kp) != (M, K):
        x2d = jnp.pad(x2d, ((0, Mp - M), (0, Kp - K)))
    if (Kp, Np) != (K, N):
        w_kn = jnp.pad(w_kn, ((0, Kp - K), (0, Np - N)))

    nk = Kp // tk
    if nk == 1:
        out = pl.pallas_call(
            _matmul_kernel,
            out_shape=jax.ShapeDtypeStruct((Mp, Np), jnp.bfloat16),
            grid=(Mp // tm, Np // tn),
            in_specs=[
                pl.BlockSpec((tm, Kp), lambda i, j: (i, 0)),
                pl.BlockSpec((Kp, tn), lambda i, j: (0, j)),
            ],
            out_specs=pl.BlockSpec((tm, tn), lambda i, j: (i, j)),
            compiler_params=pltpu.CompilerParams(
                dimension_semantics=("parallel", "parallel"),
            ),
        )(x2d, w_kn)
    else:
        out = pl.pallas_call(
            _matmul_kernel_ksplit,
            out_shape=jax.ShapeDtypeStruct((Mp, Np), jnp.bfloat16),
            grid=(Mp // tm, Np // tn, nk),
            in_specs=[
                pl.BlockSpec((tm, tk), lambda i, j, k: (i, k)),
                pl.BlockSpec((tk, tn), lambda i, j, k: (k, j)),
            ],
            out_specs=pl.BlockSpec((tm, tn), lambda i, j, k: (i, j)),
            scratch_shapes=[pltpu.VMEM((tm, tn), jnp.float32)],
            compiler_params=pltpu.CompilerParams(
                dimension_semantics=("parallel", "parallel", "arbitrary"),
            ),
        )(x2d, w_kn)

    if (Mp, Np) != (M, N):
        out = out[:M, :N]
    return out


# ---------------------------------------------------------------------------
# Attention: grid = (batch, head-group, q-tile).  q/k/v are lane-windows of the
# (B, T, 3C) qkv slab selected purely by BlockSpec index_maps; output is written
# straight into (B, T, C) layout as one lane-dense (Tq, G*hd) store per step.
# ---------------------------------------------------------------------------
def _pick_head_group(n_head, hd):
    """Smallest divisor G of n_head with (G*hd) % 128 == 0 (lane-dense group)."""
    for g in range(1, n_head + 1):
        if n_head % g == 0 and (g * hd) % 128 == 0:
            return g
    return None


def _pick_q_tile(T):
    """Query-tile size: multiple of 8 dividing T, <= 256; else full T."""
    if T <= 256:
        return T
    for t in (256, 128):
        if T % t == 0:
            return t
    for t in range(256, 7, -8):
        if T % t == 0:
            return t
    return T


def _attn_body(q_ref, k_ref, v_ref, o_ref, *, G, hd, scale, k_off, v_off, Tq):
    """Shared body.  q_ref block holds Tq query rows; k/v blocks hold all T keys."""
    T = k_ref.shape[1]
    qi = pl.program_id(2)

    # Causal mask built once per step, shared by all heads in the group.
    # NOTE: the reference's alibi_bias = clamp(i - j, min=0) * slope is exactly
    # zero on every entry the tril mask keeps, so dropping it is bit-identical.
    row = qi * Tq + lax.broadcasted_iota(jnp.int32, (Tq, T), 0)
    col = lax.broadcasted_iota(jnp.int32, (Tq, T), 1)
    keep = col <= row

    outs = []
    for gi in range(G):               # G is small (typically 2-4); static slices
        lo = gi * hd
        qh = q_ref[0, :, lo:lo + hd] * scale                 # scale folded into q
        kh = k_ref[0, :, k_off + lo:k_off + lo + hd]
        vh = v_ref[0, :, v_off + lo:v_off + lo + hd]

        # q @ k^T with f32 MXU accumulation (contract head_dim)
        s = lax.dot_general(qh, kh, (((1,), (1,)), ((), ())),
                            preferred_element_type=jnp.float32)
        s = jnp.where(keep, s, -jnp.inf)

        # Stable softmax; normalize AFTER the PV matmul (Tq x hd, not Tq x T).
        m = jnp.max(s, axis=-1, keepdims=True)
        p = jnp.exp(s - m)
        l = jnp.sum(p, axis=-1, keepdims=True)
        y = jnp.dot(p.astype(jnp.bfloat16), vh,
                    preferred_element_type=jnp.float32)
        y = y * pl.reciprocal(l, approx=True)                # EUP slot, ~free
        outs.append(y)

    y_all = outs[0] if G == 1 else jnp.concatenate(outs, axis=-1)
    o_ref[0, :, :] = y_all.astype(jnp.bfloat16)              # one lane-dense store


def _attn_kernel_grouped(q_ref, k_ref, v_ref, o_ref, *, G, hd, scale, Tq):
    _attn_body(q_ref, k_ref, v_ref, o_ref,
               G=G, hd=hd, scale=scale, k_off=0, v_off=0, Tq=Tq)


def _attn_kernel_fallback(qkv_ref, o_ref, *, n_head, hd, scale, C):
    # Single (1, T, 3C) block per batch; q/k/v are static lane offsets into it.
    _attn_body(qkv_ref, qkv_ref, qkv_ref, o_ref,
               G=n_head, hd=hd, scale=scale, k_off=C, v_off=2 * C,
               Tq=qkv_ref.shape[1])


def attention_core(qkv, *, n_head, head_dim, scale):
    """qkv: (B, T, 3C) bf16 -> (B, T, C) bf16."""
    B, T, C3 = qkv.shape
    C = C3 // 3
    hd = head_dim

    G = _pick_head_group(n_head, hd)
    if G is not None:
        n_groups = n_head // G
        GW = G * hd
        Tq = _pick_q_tile(T)
        grid = (B, n_groups, T // Tq)
        kernel = functools.partial(_attn_kernel_grouped,
                                   G=G, hd=hd, scale=scale, Tq=Tq)
        in_specs = [
            pl.BlockSpec((1, Tq, GW), lambda b, g, q: (b, q, g)),
            pl.BlockSpec((1, T, GW), lambda b, g, q: (b, 0, n_groups + g)),
            pl.BlockSpec((1, T, GW), lambda b, g, q: (b, 0, 2 * n_groups + g)),
        ]
        out_spec = pl.BlockSpec((1, Tq, GW), lambda b, g, q: (b, q, g))
        args = (qkv, qkv, qkv)
    else:
        # Fallback (no 128-aligned head grouping): whole (q|k|v) row per batch,
        # passed ONCE (single DMA / single VMEM buffer), sliced inside the kernel.
        grid = (B, 1, 1)
        kernel = functools.partial(_attn_kernel_fallback,
                                   n_head=n_head, hd=hd, scale=scale, C=C)
        in_specs = [pl.BlockSpec((1, T, C3), lambda b, g, q: (b, 0, 0))]
        out_spec = pl.BlockSpec((1, T, C), lambda b, g, q: (b, 0, 0))
        args = (qkv,)

    return pl.pallas_call(
        kernel,
        out_shape=jax.ShapeDtypeStruct((B, T, C), jnp.bfloat16),
        grid=grid,
        in_specs=in_specs,
        out_specs=out_spec,
        compiler_params=pltpu.CompilerParams(
            dimension_semantics=("parallel", "parallel", "parallel"),
        ),
    )(*args)


# ---------------------------------------------------------------------------
# Parameter prep (run ONCE, outside jit) + full forward
# ---------------------------------------------------------------------------
def prepare_params(w_attn, w_proj):
    """nn.Linear stores (out, in); pre-transpose to (in, out) and cast to bf16 once."""
    w_attn_kn = jnp.asarray(w_attn, jnp.bfloat16).T   # (C, 3C)
    w_proj_kn = jnp.asarray(w_proj, jnp.bfloat16).T   # (C, C)
    return w_attn_kn, w_proj_kn


def alibi_attention_forward(x, w_attn_kn, w_proj_kn, *, n_head):
    B, T, C = x.shape
    hd = C // n_head
    scale = 1.0 / math.sqrt(hd)

    xb = x.astype(jnp.bfloat16)

    # c_attn: (B*T, C) @ (C, 3C)
    qkv = linear_bf16(xb.reshape(B * T, C), w_attn_kn).reshape(B, T, 3 * C)

    # attention (head slicing + output layout handled by BlockSpecs, no transposes)
    y = attention_core(qkv, n_head=n_head, head_dim=hd, scale=scale)

    # c_proj: (B*T, C) @ (C, C); attn/resid dropout = identity (eval mode)
    out = linear_bf16(y.reshape(B * T, C), w_proj_kn)
    return out.reshape(B, T, C)


def get_alibi_slope(n_head):
    # Retained for faithfulness to the reference module.  The bias it feeds,
    # clamp(i - j, min=0) * slope, is identically zero on every causal-kept
    # entry, so it is never applied inside the kernels.
    x = (2 ** 8) ** (1.0 / n_head)
    s = jnp.array([1.0 / x ** (i + 1) for i in range(n_head)], dtype=jnp.bfloat16)
    return s


if __name__ == "__main__":
    # Small config consistent with the module's constraints (n_embd % n_head == 0)
    B, T = 2, 16
    n_head, n_embd = 4, 128

    key = jax.random.PRNGKey(0)
    kx, ka, kp = jax.random.split(key, 3)

    x = jax.random.normal(kx, (B, T, n_embd), dtype=jnp.float32)

    # nn.Linear(in=C, out=3C / C, bias=False) default init: U(-1/sqrt(C), 1/sqrt(C))
    bound = 1.0 / math.sqrt(n_embd)
    w_attn = jax.random.uniform(
        ka, (3 * n_embd, n_embd), minval=-bound, maxval=bound, dtype=jnp.float32
    )
    w_proj = jax.random.uniform(
        kp, (n_embd, n_embd), minval=-bound, maxval=bound, dtype=jnp.float32
    )

    # One-time parameter preparation (transpose + bf16 cast) outside the jit.
    w_attn_kn, w_proj_kn = prepare_params(w_attn, w_proj)

    fwd = jax.jit(functools.partial(alibi_attention_forward, n_head=n_head))
    y = jax.block_until_ready(fwd(x, w_attn_kn, w_proj_kn))

    assert y.shape == (B, T, n_embd)
    assert y.dtype == jnp.bfloat16
    print("KERNEL_OK")
</pallas_src>

<mosaic_0001>
module attributes {stable_mosaic.version = 11 : i64} {
  func.func @_matmul_kernel(%arg0: i32, %arg1: i32, %arg2: memref<32x128xbf16, #tpu.memory_space<vmem>>, %arg3: memref<128x384xbf16, #tpu.memory_space<vmem>>, %arg4: memref<32x384xbf16, #tpu.memory_space<vmem>>) attributes {dimension_semantics = [#tpu.dimension_semantics<parallel>, #tpu.dimension_semantics<parallel>], iteration_bounds = array<i64: 1, 1>, scalar_prefetch = 0 : i64, scratch_operands = 0 : i64, tpu.core_type = #tpu.core_type<tc>, window_params = [{transform_indices = @transform_0, window_bounds = array<i64: 32, 128>}, {transform_indices = @transform_1, window_bounds = array<i64: 128, 384>}, {transform_indices = @transform_2, window_bounds = array<i64: 32, 384>}]} {
    %c0 = arith.constant 0 : index
    %c0_0 = arith.constant 0 : index
    %0 = vector.load %arg2[%c0, %c0_0] : memref<32x128xbf16, #tpu.memory_space<vmem>>, vector<32x128xbf16>
    %c0_1 = arith.constant 0 : index
    %c0_2 = arith.constant 0 : index
    %1 = vector.load %arg3[%c0_1, %c0_2] : memref<128x384xbf16, #tpu.memory_space<vmem>>, vector<128x384xbf16>
    %cst = arith.constant dense<0.000000e+00> : vector<32x384xf32>
    %2 = tpu.matmul %0, %1, %cst {dimension_numbers = #tpu.dot_dimension_numbers<[1], [0], [0], [1], [0, 0, 1, 1], [], []>} : vector<32x128xbf16>, vector<128x384xbf16>, vector<32x384xf32> -> vector<32x384xf32>
    %3 = arith.truncf %2 : vector<32x384xf32> to vector<32x384xbf16>
    %c0_3 = arith.constant 0 : index
    %c0_4 = arith.constant 0 : index
    %4 = vector.load %arg4[%c0_3, %c0_4] : memref<32x384xbf16, #tpu.memory_space<vmem>>, vector<32x384xbf16>
    tpu.vector_store %arg4[%c0_3, %c0_4], %3 {strides = array<i32>} : memref<32x384xbf16, #tpu.memory_space<vmem>>, vector<32x384xbf16>,
    return
  }
  func.func @transform_0(%arg0: i32, %arg1: i32) -> (i32, i32) {
    %c0_i32 = arith.constant 0 : i32
    %c0_i32_0 = arith.constant 0 : i32
    return %arg0, %c0_i32 : i32, i32
  }
  func.func @transform_1(%arg0: i32, %arg1: i32) -> (i32, i32) {
    %c0_i32 = arith.constant 0 : i32
    %c0_i32_0 = arith.constant 0 : i32
    return %c0_i32, %arg1 : i32, i32
  }
  func.func @transform_2(%arg0: i32, %arg1: i32) -> (i32, i32) {
    %c0_i32 = arith.constant 0 : i32
    return %arg0, %arg1 : i32, i32
  }
}

module attributes {stable_mosaic.version = 11 : i64} {
  func.func @_attn_kernel_grouped(%arg0: i32, %arg1: i32, %arg2: i32, %arg3: memref<1x16x128xbf16, #tpu.memory_space<vmem>>, %arg4: memref<1x16x128xbf16, #tpu.memory_space<vmem>>, %arg5: memref<1x16x128xbf16, #tpu.memory_space<vmem>>, %arg6: memref<1x16x128xbf16, #tpu.memory_space<vmem>>) attributes {dimension_semantics = [#tpu.dimension_semantics<parallel>, #tpu.dimension_semantics<parallel>, #tpu.dimension_semantics<parallel>], iteration_bounds = array<i64: 2, 1, 1>, scalar_prefetch = 0 : i64, scratch_operands = 0 : i64, tpu.core_type = #tpu.core_type<tc>, window_params = [{transform_indices = @transform_0, window_bounds = array<i64: 1, 16, 128>}, {transform_indices = @transform_1, window_bounds = array<i64: 1, 16, 128>}, {transform_indices = @transform_2, window_bounds = array<i64: 1, 16, 128>}, {transform_indices = @transform_3, window_bounds = array<i64: 1, 16, 128>}]} {
    %c16_i32 = arith.constant 16 : i32
    %0 = arith.muli %arg2, %c16_i32 : i32
    %1 = tpu.iota {dimensions = array<i32: 0>} : vector<16x16xi32>
    %2 = vector.broadcast %0 : i32 to vector<16x16xi32>
    %3 = arith.addi %2, %1 : vector<16x16xi32>
    %4 = tpu.iota {dimensions = array<i32: 1>} : vector<16x16xi32>
    %5 = arith.cmpi sle, %4, %3 : vector<16x16xi32>
    %c0 = arith.constant 0 : index
    %c0_0 = arith.constant 0 : index
    %c0_1 = arith.constant 0 : index
    %6 = vector.load %arg3[%c0, %c0_0, %c0_1] : memref<1x16x128xbf16, #tpu.memory_space<vmem>>, vector<1x16x32xbf16>
    %7 = vector.shape_cast %6 : vector<1x16x32xbf16> to vector<16x32xbf16>
    %cst = arith.constant 1.767580e-01 : bf16
    %8 = vector.broadcast %cst : bf16 to vector<16x32xbf16>
    %9 = arith.mulf %7, %8 : vector<16x32xbf16>
    %c0_2 = arith.constant 0 : index
    %c0_3 = arith.constant 0 : index
    %c0_4 = arith.constant 0 : index
    %10 = vector.load %arg4[%c0_2, %c0_3, %c0_4] : memref<1x16x128xbf16, #tpu.memory_space<vmem>>, vector<1x16x32xbf16>
    %11 = vector.shape_cast %10 : vector<1x16x32xbf16> to vector<16x32xbf16>
    %c0_5 = arith.constant 0 : index
    %c0_6 = arith.constant 0 : index
    %c0_7 = arith.constant 0 : index
    %12 = vector.load %arg5[%c0_5, %c0_6, %c0_7] : memref<1x16x128xbf16, #tpu.memory_space<vmem>>, vector<1x16x32xbf16>
    %13 = vector.shape_cast %12 : vector<1x16x32xbf16> to vector<16x32xbf16>
    %cst_8 = arith.constant dense<0.000000e+00> : vector<16x16xf32>
    %14 = tpu.matmul %9, %11, %cst_8 {dimension_numbers = #tpu.dot_dimension_numbers<[1], [1], [0], [0], [0, 0, 1, 0], [], []>} : vector<16x32xbf16>, vector<16x32xbf16>, vector<16x16xf32> -> vector<16x16xf32>
    %cst_9 = arith.constant 0xFF800000 : f32
    %15 = vector.broadcast %cst_9 : f32 to vector<16x16xf32>
    %16 = arith.select %5, %14, %15 : vector<16x16xi1>, vector<16x16xf32>
    %cst_10 = arith.constant dense<0xFF800000> : vector<16xf32>
    %17 = vector.multi_reduction <maximumf>, %16, %cst_10 [1] : vector<16x16xf32> to vector<16xf32>
    %18 = vector.shape_cast %17 : vector<16xf32> to vector<16x1xf32>
    %19 = vector.broadcast %18 : vector<16x1xf32> to vector<16x16xf32>
    %20 = arith.subf %16, %19 : vector<16x16xf32>
    %21 = math.exp %20 : vector<16x16xf32>
    %cst_11 = arith.constant dense<0.000000e+00> : vector<16xf32>
    %22 = vector.multi_reduction <add>, %21, %cst_11 [1] : vector<16x16xf32> to vector<16xf32>
    %23 = vector.shape_cast %22 : vector<16xf32> to vector<16x1xf32>
    %24 = arith.truncf %21 : vector<16x16xf32> to vector<16x16xbf16>
    %cst_12 = arith.constant dense<0.000000e+00> : vector<16x32xf32>
    %25 = tpu.matmul %24, %13, %cst_12 {dimension_numbers = #tpu.dot_dimension_numbers<[1], [0], [0], [1], [0, 0, 1, 1], [], []>} : vector<16x16xbf16>, vector<16x32xbf16>, vector<16x32xf32> -> vector<16x32xf32>
    %26 = tpu.reciprocal %23 {approx = true} : vector<16x1xf32> -> vector<16x1xf32>
    %27 = vector.broadcast %26 : vector<16x1xf32> to vector<16x32xf32>
    %28 = arith.mulf %25, %27 : vector<16x32xf32>
    %c0_13 = arith.constant 0 : index
    %c0_14 = arith.constant 0 : index
    %c32 = arith.constant 32 : index
    %29 = vector.load %arg3[%c0_13, %c0_14, %c32] : memref<1x16x128xbf16, #tpu.memory_space<vmem>>, vector<1x16x32xbf16>
    %30 = vector.shape_cast %29 : vector<1x16x32xbf16> to vector<16x32xbf16>
    %cst_15 = arith.constant 1.767580e-01 : bf16
    %31 = vector.broadcast %cst_15 : bf16 to vector<16x32xbf16>
    %32 = arith.mulf %30, %31 : vector<16x32xbf16>
    %c0_16 = arith.constant 0 : index
    %c0_17 = arith.constant 0 : index
    %c32_18 = arith.constant 32 : index
    %33 = vector.load %arg4[%c0_16, %c0_17, %c32_18] : memref<1x16x128xbf16, #tpu.memory_space<vmem>>, vector<1x16x32xbf16>
    %34 = vector.shape_cast %33 : vector<1x16x32xbf16> to vector<16x32xbf16>
    %c0_19 = arith.constant 0 : index
    %c0_20 = arith.constant 0 : index
    %c32_21 = arith.constant 32 : index
    %35 = vector.load %arg5[%c0_19, %c0_20, %c32_21] : memref<1x16x128xbf16, #tpu.memory_space<vmem>>, vector<1x16x32xbf16>
    %36 = vector.shape_cast %35 : vector<1x16x32xbf16> to vector<16x32xbf16>
    %cst_22 = arith.constant dense<0.000000e+00> : vector<16x16xf32>
    %37 = tpu.matmul %32, %34, %cst_22 {dimension_numbers = #tpu.dot_dimension_numbers<[1], [1], [0], [0], [0, 0, 1, 0], [], []>} : vector<16x32xbf16>, vector<16x32xbf16>, vector<16x16xf32> -> vector<16x16xf32>
    %cst_23 = arith.constant 0xFF800000 : f32
    %38 = vector.broadcast %cst_23 : f32 to vector<16x16xf32>
    %39 = arith.select %5, %37, %38 : vector<16x16xi1>, vector<16x16xf32>
    %cst_24 = arith.constant dense<0xFF800000> : vector<16xf32>
    %40 = vector.multi_reduction <maximumf>, %39, %cst_24 [1] : vector<16x16xf32> to vector<16xf32>
    %41 = vector.shape_cast %40 : vector<16xf32> to vector<16x1xf32>
    %42 = vector.broadcast %41 : vector<16x1xf32> to vector<16x16xf32>
    %43 = arith.subf %39, %42 : vector<16x16xf32>
    %44 = math.exp %43 : vector<16x16xf32>
    %cst_25 = arith.constant dense<0.000000e+00> : vector<16xf32>
    %45 = vector.multi_reduction <add>, %44, %cst_25 [1] : vector<16x16xf32> to vector<16xf32>
    %46 = vector.shape_cast %45 : vector<16xf32> to vector<16x1xf32>
    %47 = arith.truncf %44 : vector<16x16xf32> to vector<16x16xbf16>
    %cst_26 = arith.constant dense<0.000000e+00> : vector<16x32xf32>
    %48 = tpu.matmul %47, %36, %cst_26 {dimension_numbers = #tpu.dot_dimension_numbers<[1], [0], [0], [1], [0, 0, 1, 1], [], []>} : vector<16x16xbf16>, vector<16x32xbf16>, vector<16x32xf32> -> vector<16x32xf32>
    %49 = tpu.reciprocal %46 {approx = true} : vector<16x1xf32> -> vector<16x1xf32>
    %50 = vector.broadcast %49 : vector<16x1xf32> to vector<16x32xf32>
    %51 = arith.mulf %48, %50 : vector<16x32xf32>
    %c0_27 = arith.constant 0 : index
    %c0_28 = arith.constant 0 : index
    %c64 = arith.constant 64 : index
    %52 = vector.load %arg3[%c0_27, %c0_28, %c64] : memref<1x16x128xbf16, #tpu.memory_space<vmem>>, vector<1x16x32xbf16>
    %53 = vector.shape_cast %52 : vector<1x16x32xbf16> to vector<16x32xbf16>
    %cst_29 = arith.constant 1.767580e-01 : bf16
    %54 = vector.broadcast %cst_29 : bf16 to vector<16x32xbf16>
    %55 = arith.mulf %53, %54 : vector<16x32xbf16>
    %c0_30 = arith.constant 0 : index
    %c0_31 = arith.constant 0 : index
    %c64_32 = arith.constant 64 : index
    %56 = vector.load %arg4[%c0_30, %c0_31, %c64_32] : memref<1x16x128xbf16, #tpu.memory_space<vmem>>, vector<1x16x32xbf16>
    %57 = vector.shape_cast %56 : vector<1x16x32xbf16> to vector<16x32xbf16>
    %c0_33 = arith.constant 0 : index
    %c0_34 = arith.constant 0 : index
    %c64_35 = arith.constant 64 : index
    %58 = vector.load %arg5[%c0_33, %c0_34, %c64_35] : memref<1x16x128xbf16, #tpu.memory_space<vmem>>, vector<1x16x32xbf16>
    %59 = vector.shape_cast %58 : vector<1x16x32xbf16> to vector<16x32xbf16>
    %cst_36 = arith.constant dense<0.000000e+00> : vector<16x16xf32>
    %60 = tpu.matmul %55, %57, %cst_36 {dimension_numbers = #tpu.dot_dimension_numbers<[1], [1], [0], [0], [0, 0, 1, 0], [], []>} : vector<16x32xbf16>, vector<16x32xbf16>, vector<16x16xf32> -> vector<16x16xf32>
    %cst_37 = arith.constant 0xFF800000 : f32
    %61 = vector.broadcast %cst_37 : f32 to vector<16x16xf32>
    %62 = arith.select %5, %60, %61 : vector<16x16xi1>, vector<16x16xf32>
    %cst_38 = arith.constant dense<0xFF800000> : vector<16xf32>
    %63 = vector.multi_reduction <maximumf>, %62, %cst_38 [1] : vector<16x16xf32> to vector<16xf32>
    %64 = vector.shape_cast %63 : vector<16xf32> to vector<16x1xf32>
    %65 = vector.broadcast %64 : vector<16x1xf32> to vector<16x16xf32>
    %66 = arith.subf %62, %65 : vector<16x16xf32>
    %67 = math.exp %66 : vector<16x16xf32>
    %cst_39 = arith.constant dense<0.000000e+00> : vector<16xf32>
    %68 = vector.multi_reduction <add>, %67, %cst_39 [1] : vector<16x16xf32> to vector<16xf32>
    %69 = vector.shape_cast %68 : vector<16xf32> to vector<16x1xf32>
    %70 = arith.truncf %67 : vector<16x16xf32> to vector<16x16xbf16>
    %cst_40 = arith.constant dense<0.000000e+00> : vector<16x32xf32>
    %71 = tpu.matmul %70, %59, %cst_40 {dimension_numbers = #tpu.dot_dimension_numbers<[1], [0], [0], [1], [0, 0, 1, 1], [], []>} : vector<16x16xbf16>, vector<16x32xbf16>, vector<16x32xf32> -> vector<16x32xf32>
    %72 = tpu.reciprocal %69 {approx = true} : vector<16x1xf32> -> vector<16x1xf32>
    %73 = vector.broadcast %72 : vector<16x1xf32> to vector<16x32xf32>
    %74 = arith.mulf %71, %73 : vector<16x32xf32>
    %c0_41 = arith.constant 0 : index
    %c0_42 = arith.constant 0 : index
    %c96 = arith.constant 96 : index
    %75 = vector.load %arg3[%c0_41, %c0_42, %c96] : memref<1x16x128xbf16, #tpu.memory_space<vmem>>, vector<1x16x32xbf16>
    %76 = vector.shape_cast %75 : vector<1x16x32xbf16> to vector<16x32xbf16>
    %cst_43 = arith.constant 1.767580e-01 : bf16
    %77 = vector.broadcast %cst_43 : bf16 to vector<16x32xbf16>
    %78 = arith.mulf %76, %77 : vector<16x32xbf16>
    %c0_44 = arith.constant 0 : index
    %c0_45 = arith.constant 0 : index
    %c96_46 = arith.constant 96 : index
    %79 = vector.load %arg4[%c0_44, %c0_45, %c96_46] : memref<1x16x128xbf16, #tpu.memory_space<vmem>>, vector<1x16x32xbf16>
    %80 = vector.shape_cast %79 : vector<1x16x32xbf16> to vector<16x32xbf16>
    %c0_47 = arith.constant 0 : index
    %c0_48 = arith.constant 0 : index
    %c96_49 = arith.constant 96 : index
    %81 = vector.load %arg5[%c0_47, %c0_48, %c96_49] : memref<1x16x128xbf16, #tpu.memory_space<vmem>>, vector<1x16x32xbf16>
    %82 = vector.shape_cast %81 : vector<1x16x32xbf16> to vector<16x32xbf16>
    %cst_50 = arith.constant dense<0.000000e+00> : vector<16x16xf32>
    %83 = tpu.matmul %78, %80, %cst_50 {dimension_numbers = #tpu.dot_dimension_numbers<[1], [1], [0], [0], [0, 0, 1, 0], [], []>} : vector<16x32xbf16>, vector<16x32xbf16>, vector<16x16xf32> -> vector<16x16xf32>
    %cst_51 = arith.constant 0xFF800000 : f32
    %84 = vector.broadcast %cst_51 : f32 to vector<16x16xf32>
    %85 = arith.select %5, %83, %84 : vector<16x16xi1>, vector<16x16xf32>
    %cst_52 = arith.constant dense<0xFF800000> : vector<16xf32>
    %86 = vector.multi_reduction <maximumf>, %85, %cst_52 [1] : vector<16x16xf32> to vector<16xf32>
    %87 = vector.shape_cast %86 : vector<16xf32> to vector<16x1xf32>
    %88 = vector.broadcast %87 : vector<16x1xf32> to vector<16x16xf32>
    %89 = arith.subf %85, %88 : vector<16x16xf32>
    %90 = math.exp %89 : vector<16x16xf32>
    %cst_53 = arith.constant dense<0.000000e+00> : vector<16xf32>
    %91 = vector.multi_reduction <add>, %90, %cst_53 [1] : vector<16x16xf32> to vector<16xf32>
    %92 = vector.shape_cast %91 : vector<16xf32> to vector<16x1xf32>
    %93 = arith.truncf %90 : vector<16x16xf32> to vector<16x16xbf16>
    %cst_54 = arith.constant dense<0.000000e+00> : vector<16x32xf32>
    %94 = tpu.matmul %93, %82, %cst_54 {dimension_numbers = #tpu.dot_dimension_numbers<[1], [0], [0], [1], [0, 0, 1, 1], [], []>} : vector<16x16xbf16>, vector<16x32xbf16>, vector<16x32xf32> -> vector<16x32xf32>
    %95 = tpu.reciprocal %92 {approx = true} : vector<16x1xf32> -> vector<16x1xf32>
    %96 = vector.broadcast %95 : vector<16x1xf32> to vector<16x32xf32>
    %97 = arith.mulf %94, %96 : vector<16x32xf32>
    %98 = tpu.concatenate %28, %51, %74, %97 in 1 : vector<16x32xf32>, vector<16x32xf32>, vector<16x32xf32>, vector<16x32xf32> -> vector<16x128xf32>
    %99 = arith.truncf %98 : vector<16x128xf32> to vector<16x128xbf16>
    %c0_55 = arith.constant 0 : index
    %c0_56 = arith.constant 0 : index
    %c0_57 = arith.constant 0 : index
    %100 = vector.load %arg6[%c0_55, %c0_56, %c0_57] : memref<1x16x128xbf16, #tpu.memory_space<vmem>>, vector<1x16x128xbf16>
    %101 = vector.shape_cast %100 : vector<1x16x128xbf16> to vector<16x128xbf16>
    %102 = vector.shape_cast %99 : vector<16x128xbf16> to vector<1x16x128xbf16>
    tpu.vector_store %arg6[%c0_55, %c0_56, %c0_57], %102 {strides = array<i32>} : memref<1x16x128xbf16, #tpu.memory_space<vmem>>, vector<1x16x128xbf16>,
    return
  }
  func.func @transform_0(%arg0: i32, %arg1: i32, %arg2: i32) -> (i32, i32, i32) {
    %c0_i32 = arith.constant 0 : i32
    return %arg0, %arg2, %arg1 : i32, i32, i32
  }
  func.func @transform_1(%arg0: i32, %arg1: i32, %arg2: i32) -> (i32, i32, i32) {
    %c1_i32 = arith.constant 1 : i32
    %0 = arith.addi %c1_i32, %arg1 : i32
    %c0_i32 = arith.constant 0 : i32
    %c0_i32_0 = arith.constant 0 : i32
    return %arg0, %c0_i32, %0 : i32, i32, i32
  }
  func.func @transform_2(%arg0: i32, %arg1: i32, %arg2: i32) -> (i32, i32, i32) {
    %c2_i32 = arith.constant 2 : i32
    %0 = arith.addi %c2_i32, %arg1 : i32
    %c0_i32 = arith.constant 0 : i32
    %c0_i32_0 = arith.constant 0 : i32
    return %arg0, %c0_i32, %0 : i32, i32, i32
  }
  func.func @transform_3(%arg0: i32, %arg1: i32, %arg2: i32) -> (i32, i32, i32) {
    %c0_i32 = arith.constant 0 : i32
    return %arg0, %arg2, %arg1 : i32, i32, i32
  }
}

module attributes {stable_mosaic.version = 11 : i64} {
  func.func @_matmul_kernel(%arg0: i32, %arg1: i32, %arg2: memref<32x128xbf16, #tpu.memory_space<vmem>>, %arg3: memref<128x128xbf16, #tpu.memory_space<vmem>>, %arg4: memref<32x128xbf16, #tpu.memory_space<vmem>>) attributes {dimension_semantics = [#tpu.dimension_semantics<parallel>, #tpu.dimension_semantics<parallel>], iteration_bounds = array<i64: 1, 1>, scalar_prefetch = 0 : i64, scratch_operands = 0 : i64, tpu.core_type = #tpu.core_type<tc>, window_params = [{transform_indices = @transform_0, window_bounds = array<i64: 32, 128>}, {transform_indices = @transform_1, window_bounds = array<i64: 128, 128>}, {transform_indices = @transform_2, window_bounds = array<i64: 32, 128>}]} {
    %c0 = arith.constant 0 : index
    %c0_0 = arith.constant 0 : index
    %0 = vector.load %arg2[%c0, %c0_0] : memref<32x128xbf16, #tpu.memory_space<vmem>>, vector<32x128xbf16>
    %c0_1 = arith.constant 0 : index
    %c0_2 = arith.constant 0 : index
    %1 = vector.load %arg3[%c0_1, %c0_2] : memref<128x128xbf16, #tpu.memory_space<vmem>>, vector<128x128xbf16>
    %cst = arith.constant dense<0.000000e+00> : vector<32x128xf32>
    %2 = tpu.matmul %0, %1, %cst {dimension_numbers = #tpu.dot_dimension_numbers<[1], [0], [0], [1], [0, 0, 1, 1], [], []>} : vector<32x128xbf16>, vector<128x128xbf16>, vector<32x128xf32> -> vector<32x128xf32>
    %3 = arith.truncf %2 : vector<32x128xf32> to vector<32x128xbf16>
    %c0_3 = arith.constant 0 : index
    %c0_4 = arith.constant 0 : index
    %4 = vector.load %arg4[%c0_3, %c0_4] : memref<32x128xbf16, #tpu.memory_space<vmem>>, vector<32x128xbf16>
    tpu.vector_store %arg4[%c0_3, %c0_4], %3 {strides = array<i32>} : memref<32x128xbf16, #tpu.memory_space<vmem>>, vector<32x128xbf16>,
    return
  }
  func.func @transform_0(%arg0: i32, %arg1: i32) -> (i32, i32) {
    %c0_i32 = arith.constant 0 : i32
    %c0_i32_0 = arith.constant 0 : i32
    return %arg0, %c0_i32 : i32, i32
  }
  func.func @transform_1(%arg0: i32, %arg1: i32) -> (i32, i32) {
    %c0_i32 = arith.constant 0 : i32
    %c0_i32_0 = arith.constant 0 : i32
    return %c0_i32, %arg1 : i32, i32
  }
  func.func @transform_2(%arg0: i32, %arg1: i32) -> (i32, i32) {
    %c0_i32 = arith.constant 0 : i32
    return %arg0, %arg1 : i32, i32
  }
}

</mosaic_0001>

<llo_original>
// kernel: alibi_attention_forward.5
$region0: #{alibi_attention_forward.5}
  #allocation0 [shape = 'u32[]', space=smem, size = 0x4, offset = 0x4, fixed_abs, tag = 'smem constant byte address 0x4 - core index']
  #allocation1 [shape = 'u32[144,128]{1,0:T(1,128)}', space=vmem, size = 0x12000, scoped, tag = 'internal scratch']
  %s0 = inlined_call_operand.vmem [shape: bf16[32,128], index: 0, kind: input, shape index: {}]
  %s1 = inlined_call_operand.vmem [shape: bf16[128,128], index: 1, kind: input, shape index: {}]
  %s2 = inlined_call_operand.hbm [shape: bf16[32,128], index: 2, kind: output, shape index: {}]
  %s3 = sld [smem:[#allocation0]]
  $region18: #{alibi_attention_forward.5} parent=0
    _
  %s5 = ssub.s32 1, %s3
  %s6 = scalar_select 0, %s5, %s3
  $region1: #{alibi_attention_forward.5} parent=0
    #allocation2 [shape = 'u8[8192]{0}', space=vmem, size = 0x2000, scoped, tag = 'output window, operand 0, single buffered']
    #allocation3 [shape = 's32[1]{0}', space=sflag, size = 0x4, scoped, tag = 'scoped memory for alibi_attention_forward.5']
    %7 = vsyncpa [#allocation3], 0
    // Predicated region
    $region2: #{alibi_attention_forward.5} parent=1 // pred_check
      _
    $region3: #{alibi_attention_forward.5} parent=1 // pred_check_branch
      %9 = sbr.rel (0) target = $region5
    $region4: #{alibi_attention_forward.5} parent=1 // pred_region
      _
    $region5: #{alibi_attention_forward.5} parent=1 // pred_fallthru
      _
    // Predicated region
    $region6: #{alibi_attention_forward.5} parent=1 // pred_check
      _
    $region7: #{alibi_attention_forward.5} parent=1 // pred_check_branch
      %11 = sbr.rel (0) target = $region9
    $region8: #{alibi_attention_forward.5} parent=1 // pred_region
      _
    $region9: #{alibi_attention_forward.5} parent=1 // pred_fallthru
      _
    %v13 = vld [vmem:[%s0] sm:$0xf]
    %v14 = vld [vmem:[%s0 + $0x4] sm:$0xf]
    %v15 = vld [vmem:[%s0 + $0x8] sm:$0xf]
    %v16 = vld [vmem:[%s0 + $0xc] sm:$0xf]
    %v17 = vld [vmem:[%s1] sm:$0xf]
    %v18 = vld [vmem:[%s1 + $0x4] sm:$0xf]
    %v19 = vld [vmem:[%s1 + $0x8] sm:$0xf]
    %v20 = vld [vmem:[%s1 + $0xc] sm:$0xf]
    %v21 = vld [vmem:[%s1 + $0x10] sm:$0xf]
    %v22 = vld [vmem:[%s1 + $0x14] sm:$0xf]
    %v23 = vld [vmem:[%s1 + $0x18] sm:$0xf]
    %v24 = vld [vmem:[%s1 + $0x1c] sm:$0xf]
    %v25 = vld [vmem:[%s1 + $0x20] sm:$0xf]
    %v26 = vld [vmem:[%s1 + $0x24] sm:$0xf]
    %v27 = vld [vmem:[%s1 + $0x28] sm:$0xf]
    %v28 = vld [vmem:[%s1 + $0x2c] sm:$0xf]
    %v29 = vld [vmem:[%s1 + $0x30] sm:$0xf]
    %v30 = vld [vmem:[%s1 + $0x34] sm:$0xf]
    %v31 = vld [vmem:[%s1 + $0x38] sm:$0xf]
    %v32 = vld [vmem:[%s1 + $0x3c] sm:$0xf]
    %v37 = vunpack.c.l.b16 %v13
    %v38 = vunpack.c.l.b16 %v14
    %v39 = vunpack.c.l.b16 %v15
    %v40 = vunpack.c.l.b16 %v16
    %v41 = vpack.c.b16 %v38, %v37
    %v42 = vpack.c.b16 %v40, %v39
    %v61 = vunpack.c.l.b16 %v17
    %v62 = vunpack.c.l.b16 %v18
    %v63 = vunpack.c.l.b16 %v19
    %v64 = vunpack.c.l.b16 %v20
    %v65 = vunpack.c.l.b16 %v21
    %v66 = vunpack.c.l.b16 %v22
    %v67 = vunpack.c.l.b16 %v23
    %v68 = vunpack.c.l.b16 %v24
    %v69 = vunpack.c.l.b16 %v25
    %v70 = vunpack.c.l.b16 %v26
    %v71 = vunpack.c.l.b16 %v27
    %v72 = vunpack.c.l.b16 %v28
    %v73 = vunpack.c.l.b16 %v29
    %v74 = vunpack.c.l.b16 %v30
    %v75 = vunpack.c.l.b16 %v31
    %v76 = vunpack.c.l.b16 %v32
    %v77 = vpack.c.b16 %v62, %v61
    %v78 = vpack.c.b16 %v64, %v63
    %v79 = vpack.c.b16 %v66, %v65
    %v80 = vpack.c.b16 %v68, %v67
    %v81 = vpack.c.b16 %v70, %v69
    %v82 = vpack.c.b16 %v72, %v71
    %v83 = vpack.c.b16 %v74, %v73
    %v84 = vpack.c.b16 %v76, %v75
    %93 = vmatprep.subr.bf16.mxu0 0
    %94 = vmatpush1.bf16.msra.mxu0 %v84
    %95 = vmatprep.subr.bf16.mxu0 0
    %96 = vmatpush1.bf16.msra.mxu0 %v83
    %97 = vmatprep.subr.bf16.mxu0 0
    %98 = vmatpush1.bf16.msra.mxu0 %v82
    %99 = vmatprep.subr.bf16.mxu0 0
    %100 = vmatpush1.bf16.msra.mxu0 %v81
    %101 = vmatprep.subr.bf16.mxu0 0
    %102 = vmatpush1.bf16.msra.mxu0 %v80
    %103 = vmatprep.subr.bf16.mxu0 0
    %104 = vmatpush1.bf16.msra.mxu0 %v79
    %105 = vmatprep.subr.bf16.mxu0 0
    %106 = vmatpush1.bf16.msra.mxu0 %v78
    %107 = vmatprep.subr.bf16.mxu0 0
    %108 = vmatpush1.bf16.msra.mxu0 %v77
    %109 = vmatprep.subr.bf16.mxu0 0
    %110 = vmatpush2.bf16.msra.mxu0 0
    %111 = vmatprep.subr.bf16.mxu0 0
    %112 = vmatpush2.bf16.msra.mxu0 0
    %113 = vmatprep.subr.bf16.mxu0 0
    %114 = vmatpush2.bf16.msra.mxu0 0
    %115 = vmatprep.subr.bf16.mxu0 0
    %116 = vmatpush2.bf16.msra.mxu0 0
    %117 = vmatprep.subr.bf16.mxu0 0
    %118 = vmatpush2.bf16.msra.mxu0 0
    %119 = vmatprep.subr.bf16.mxu0 0
    %120 = vmatpush2.bf16.msra.mxu0 0
    %121 = vmatprep.subr.bf16.mxu0 0
    %122 = vmatpush2.bf16.msra.mxu0 0
    %123 = vmatprep.subr.bf16.mxu0 0
    %124 = vmatpush2.bf16.msra.mxu0 0
    %125 = vmatprep.mubr.bf16.mxu0 0
    %126 = vmatmul.mubr.bf16.gmra.mxu0 %v41
    %v127 = vpop.f32.mrf.mxu0
    %v128 = vadd.f32 0.0, %v127
    %v129 = vpop.f32.mrf.mxu0
    %v130 = vpop.f32.mrf.mxu0
    %v131 = vadd.f32 0.0, %v130
    %v132 = vpop.f32.mrf.mxu0
    %133 = vmatprep.mubr.bf16.mxu0 0
    %134 = vmatmul.mubr.bf16.gmra.mxu0 %v42
    %v135 = vpop.f32.mrf.mxu0
    %v136 = vadd.f32 0.0, %v135
    %v137 = vpop.f32.mrf.mxu0
    %v138 = vpop.f32.mrf.mxu0
    %v139 = vadd.f32 0.0, %v138
    %v140 = vpop.f32.mrf.mxu0
    %141 = vdwg.mxu0
    %v142 = vpack.c.bf16 %v131, %v128
    %v143 = vpack.c.bf16 %v139, %v136
    %v146 = vunpack.c.l.b16 %v142
    %v147 = vunpack.c.h.b16 %v142
    %v148 = vunpack.c.l.b16 %v143
    %v149 = vunpack.c.h.b16 %v143
    %v150 = vpack.c.b16 %v146, %v146
    %v151 = vpack.c.b16 %v147, %v147
    %v152 = vpack.c.b16 %v148, %v148
    %v153 = vpack.c.b16 %v149, %v149
    %158 = vst [vmem:[#allocation2] sm:$0xf] %v150
    %159 = vst [vmem:[#allocation2 + $0x4] sm:$0xf] %v151
    %160 = vst [vmem:[#allocation2 + $0x8] sm:$0xf] %v152
    %161 = vst [vmem:[#allocation2 + $0xc] sm:$0xf] %v153
    // Predicated region
    $region10: #{alibi_attention_forward.5} parent=1 // pred_check
      _
    $region11: #{alibi_attention_forward.5} parent=1 // pred_check_branch
      %163 = sbr.rel (0) target = $region13
    $region12: #{alibi_attention_forward.5} parent=1 // pred_region
      %s165 = ssub.s32 256, 256
      %166 = vsyncadd [#allocation3], %s165
      %s167 = sshll.u32 [#allocation2], 4
      %s168 = int_to_ptr.vmem [resolvable:$true] %s167
      %173 = dma.vmem_to_hbm [thread:$0]  %s168, 256, %s2, [#allocation3], 64, 64, 4
    $region13: #{alibi_attention_forward.5} parent=1 // pred_fallthru
      _
    // Predicated region
    $region14: #{alibi_attention_forward.5} parent=1 // pred_check
      _
    $region15: #{alibi_attention_forward.5} parent=1 // pred_check_branch
      %175 = sbr.rel (0) target = $region17
    $region16: #{alibi_attention_forward.5} parent=1 // pred_region
      %176 = dma.done [#allocation3], 256
    $region17: #{alibi_attention_forward.5} parent=1 // pred_fallthru
      _
    %177 = vsyncpa [#allocation3], 1

// kernel: alibi_attention_forward.3
$region0: #{alibi_attention_forward.3}
  #allocation0 [shape = 'u32[]', space=smem, size = 0x4, offset = 0x4, fixed_abs, tag = 'smem constant byte address 0x4 - core index']
  #allocation1 [shape = 'u32[144,128]{1,0:T(1,128)}', space=vmem, size = 0x12000, scoped, tag = 'internal scratch']
  %s0 = inlined_call_operand.vmem [shape: bf16[32,128], index: 0, kind: input, shape index: {}]
  %s1 = inlined_call_operand.hbm [shape: bf16[128,384], index: 1, kind: input, shape index: {}]
  %s2 = inlined_call_operand.vmem [shape: bf16[32,384], index: 2, kind: output, shape index: {}]
  %s3 = sld [smem:[#allocation0]]
  $region22: #{alibi_attention_forward.3} parent=0
    _
  %s5 = ssub.s32 1, %s3
  %s6 = scalar_select 0, %s5, %s3
  $region1: #{alibi_attention_forward.3} parent=0
    #allocation2 [shape = 'u8[98304]{0}', space=vmem, size = 0x18000, scoped, tag = 'input window, operand 1, single buffered']
    #allocation3 [shape = 's32[1]{0}', space=sflag, size = 0x4, scoped, tag = 'scoped memory for alibi_attention_forward.3']
    %7 = vsyncpa [#allocation3], 0
    // Predicated region
    $region2: #{alibi_attention_forward.3} parent=1 // pred_check
      _
    $region3: #{alibi_attention_forward.3} parent=1 // pred_check_branch
      %9 = sbr.rel (0) target = $region5
    $region4: #{alibi_attention_forward.3} parent=1 // pred_region
      _
    $region5: #{alibi_attention_forward.3} parent=1 // pred_fallthru
      _
    // Predicated region
    $region6: #{alibi_attention_forward.3} parent=1 // pred_check
      _
    $region7: #{alibi_attention_forward.3} parent=1 // pred_check_branch
      %11 = sbr.rel (0) target = $region9
    $region8: #{alibi_attention_forward.3} parent=1 // pred_region
      %s13 = ssub.s32 3072, 3072
      %14 = vsyncadd [#allocation3], %s13
      %s15 = sshll.u32 [#allocation2], 4
      %s16 = int_to_ptr.vmem [resolvable:$true] %s15
      %21 = dma.hbm_to_vmem [thread:$0]  %s1, 3072, %s16, [#allocation3], 192, 192, 12
    $region9: #{alibi_attention_forward.3} parent=1 // pred_fallthru
      _
    // Predicated region
    $region10: #{alibi_attention_forward.3} parent=1 // pred_check
      _
    $region11: #{alibi_attention_forward.3} parent=1 // pred_check_branch
      %23 = sbr.rel (0) target = $region13
    $region12: #{alibi_attention_forward.3} parent=1 // pred_region
      %24 = dma.done [#allocation3], 3072
    $region13: #{alibi_attention_forward.3} parent=1 // pred_fallthru
      _
    %v26 = vld [vmem:[%s0] sm:$0xf]
    %v27 = vld [vmem:[%s0 + $0x4] sm:$0xf]
    %v28 = vld [vmem:[%s0 + $0x8] sm:$0xf]
    %v29 = vld [vmem:[%s0 + $0xc] sm:$0xf]
    %v30 = vld [vmem:[#allocation2] sm:$0xff]
    %v31 = vld [vmem:[#allocation2 + $0x8] sm:$0xf]
    %v32 = vld [vmem:[#allocation2 + $0xc] sm:$0xff]
    %v33 = vld [vmem:[#allocation2 + $0x14] sm:$0xf]
    %v34 = vld [vmem:[#allocation2 + $0x18] sm:$0xff]
    %v35 = vld [vmem:[#allocation2 + $0x20] sm:$0xf]
    %v36 = vld [vmem:[#allocation2 + $0x24] sm:$0xff]
    %v37 = vld [vmem:[#allocation2 + $0x2c] sm:$0xf]
    %v38 = vld [vmem:[#allocation2 + $0x30] sm:$0xff]
    %v39 = vld [vmem:[#allocation2 + $0x38] sm:$0xf]
    %v40 = vld [vmem:[#allocation2 + $0x3c] sm:$0xff]
    %v41 = vld [vmem:[#allocation2 + $0x44] sm:$0xf]
    %v42 = vld [vmem:[#allocation2 + $0x48] sm:$0xff]
    %v43 = vld [vmem:[#allocation2 + $0x50] sm:$0xf]
    %v44 = vld [vmem:[#allocation2 + $0x54] sm:$0xff]
    %v45 = vld [vmem:[#allocation2 + $0x5c] sm:$0xf]
    %v46 = vld [vmem:[#allocation2 + $0x60] sm:$0xff]
    %v47 = vld [vmem:[#allocation2 + $0x68] sm:$0xf]
    %v48 = vld [vmem:[#allocation2 + $0x6c] sm:$0xff]
    %v49 = vld [vmem:[#allocation2 + $0x74] sm:$0xf]
    %v50 = vld [vmem:[#allocation2 + $0x78] sm:$0xff]
    %v51 = vld [vmem:[#allocation2 + $0x80] sm:$0xf]
    %v52 = vld [vmem:[#allocation2 + $0x84] sm:$0xff]
    %v53 = vld [vmem:[#allocation2 + $0x8c] sm:$0xf]
    %v54 = vld [vmem:[#allocation2 + $0x90] sm:$0xff]
    %v55 = vld [vmem:[#allocation2 + $0x98] sm:$0xf]
    %v56 = vld [vmem:[#allocation2 + $0x9c] sm:$0xff]
    %v57 = vld [vmem:[#allocation2 + $0xa4] sm:$0xf]
    %v58 = vld [vmem:[#allocation2 + $0xa8] sm:$0xff]
    %v59 = vld [vmem:[#allocation2 + $0xb0] sm:$0xf]
    %v60 = vld [vmem:[#allocation2 + $0xb4] sm:$0xff]
    %v61 = vld [vmem:[#allocation2 + $0xbc] sm:$0xf]
    %v66 = vunpack.c.l.b16 %v26
    %v67 = vunpack.c.l.b16 %v27
    %v68 = vunpack.c.l.b16 %v28
    %v69 = vunpack.c.l.b16 %v29
    %v70 = vpack.c.b16 %v67, %v66
    %v71 = vpack.c.b16 %v69, %v68
    %v106 = vunpack.c.l.b16 %v30
    %v107 = vunpack.c.h.b16 %v30
    %v108 = vunpack.c.l.b16 %v31
    %v109 = vunpack.c.l.b16 %v32
    %v110 = vunpack.c.h.b16 %v32
    %v111 = vunpack.c.l.b16 %v33
    %v112 = vunpack.c.l.b16 %v34
    %v113 = vunpack.c.h.b16 %v34
    %v114 = vunpack.c.l.b16 %v35
    %v115 = vunpack.c.l.b16 %v36
    %v116 = vunpack.c.h.b16 %v36
    %v117 = vunpack.c.l.b16 %v37
    %v118 = vunpack.c.l.b16 %v38
    %v119 = vunpack.c.h.b16 %v38
    %v120 = vunpack.c.l.b16 %v39
    %v121 = vunpack.c.l.b16 %v40
    %v122 = vunpack.c.h.b16 %v40
    %v123 = vunpack.c.l.b16 %v41
    %v124 = vunpack.c.l.b16 %v42
    %v125 = vunpack.c.h.b16 %v42
    %v126 = vunpack.c.l.b16 %v43
    %v127 = vunpack.c.l.b16 %v44
    %v128 = vunpack.c.h.b16 %v44
    %v129 = vunpack.c.l.b16 %v45
    %v130 = vunpack.c.l.b16 %v46
    %v131 = vunpack.c.h.b16 %v46
    %v132 = vunpack.c.l.b16 %v47
    %v133 = vunpack.c.l.b16 %v48
    %v134 = vunpack.c.h.b16 %v48
    %v135 = vunpack.c.l.b16 %v49
    %v136 = vunpack.c.l.b16 %v50
    %v137 = vunpack.c.h.b16 %v50
    %v138 = vunpack.c.l.b16 %v51
    %v139 = vunpack.c.l.b16 %v52
    %v140 = vunpack.c.h.b16 %v52
    %v141 = vunpack.c.l.b16 %v53
    %v142 = vunpack.c.l.b16 %v54
    %v143 = vunpack.c.h.b16 %v54
    %v144 = vunpack.c.l.b16 %v55
    %v145 = vunpack.c.l.b16 %v56
    %v146 = vunpack.c.h.b16 %v56
    %v147 = vunpack.c.l.b16 %v57
    %v148 = vunpack.c.l.b16 %v58
    %v149 = vunpack.c.h.b16 %v58
    %v150 = vunpack.c.l.b16 %v59
    %v151 = vunpack.c.l.b16 %v60
    %v152 = vunpack.c.h.b16 %v60
    %v153 = vunpack.c.l.b16 %v61
    %v154 = vpack.c.b16 %v109, %v106
    %v155 = vpack.c.b16 %v110, %v107
    %v156 = vpack.c.b16 %v111, %v108
    %v157 = vpack.c.b16 %v115, %v112
    %v158 = vpack.c.b16 %v116, %v113
    %v159 = vpack.c.b16 %v117, %v114
    %v160 = vpack.c.b16 %v121, %v118
    %v161 = vpack.c.b16 %v122, %v119
    %v162 = vpack.c.b16 %v123, %v120
    %v163 = vpack.c.b16 %v127, %v124
    %v164 = vpack.c.b16 %v128, %v125
    %v165 = vpack.c.b16 %v129, %v126
    %v166 = vpack.c.b16 %v133, %v130
    %v167 = vpack.c.b16 %v134, %v131
    %v168 = vpack.c.b16 %v135, %v132
    %v169 = vpack.c.b16 %v139, %v136
    %v170 = vpack.c.b16 %v140, %v137
    %v171 = vpack.c.b16 %v141, %v138
    %v172 = vpack.c.b16 %v145, %v142
    %v173 = vpack.c.b16 %v146, %v143
    %v174 = vpack.c.b16 %v147, %v144
    %v175 = vpack.c.b16 %v151, %v148
    %v176 = vpack.c.b16 %v152, %v149
    %v177 = vpack.c.b16 %v153, %v150
    %202 = vmatprep.subr.bf16.mxu0 %v176
    %203 = vmatpush1.bf16.msra.mxu0 %v175
    %204 = vmatprep.subr.bf16.mxu0 %v173
    %205 = vmatpush1.bf16.msra.mxu0 %v172
    %206 = vmatprep.subr.bf16.mxu0 %v170
    %207 = vmatpush1.bf16.msra.mxu0 %v169
    %208 = vmatprep.subr.bf16.mxu0 %v167
    %209 = vmatpush1.bf16.msra.mxu0 %v166
    %210 = vmatprep.subr.bf16.mxu0 %v164
    %211 = vmatpush1.bf16.msra.mxu0 %v163
    %212 = vmatprep.subr.bf16.mxu0 %v161
    %213 = vmatpush1.bf16.msra.mxu0 %v160
    %214 = vmatprep.subr.bf16.mxu0 %v158
    %215 = vmatpush1.bf16.msra.mxu0 %v157
    %216 = vmatprep.subr.bf16.mxu0 %v155
    %217 = vmatpush1.bf16.msra.mxu0 %v154
    %218 = vmatprep.subr.bf16.mxu0 0
    %219 = vmatpush2.bf16.msra.mxu0 0
    %220 = vmatprep.subr.bf16.mxu0 0
    %221 = vmatpush2.bf16.msra.mxu0 0
    %222 = vmatprep.subr.bf16.mxu0 0
    %223 = vmatpush2.bf16.msra.mxu0 0
    %224 = vmatprep.subr.bf16.mxu0 0
    %225 = vmatpush2.bf16.msra.mxu0 0
    %226 = vmatprep.subr.bf16.mxu0 0
    %227 = vmatpush2.bf16.msra.mxu0 0
    %228 = vmatprep.subr.bf16.mxu0 0
    %229 = vmatpush2.bf16.msra.mxu0 0
    %230 = vmatprep.subr.bf16.mxu0 0
    %231 = vmatpush2.bf16.msra.mxu0 0
    %232 = vmatprep.subr.bf16.mxu0 0
    %233 = vmatpush2.bf16.msra.mxu0 0
    %234 = vmatprep.mubr.bf16.mxu0 0
    %235 = vmatmul.mubr.bf16.gmra.mxu0 %v70
    %v236 = vpop.f32.mrf.mxu0
    %v237 = vadd.f32 0.0, %v236
    %v238 = vpop.f32.mrf.mxu0
    %v239 = vadd.f32 0.0, %v238
    %v240 = vpop.f32.mrf.mxu0
    %v241 = vadd.f32 0.0, %v240
    %v242 = vpop.f32.mrf.mxu0
    %v243 = vadd.f32 0.0, %v242
    %244 = vmatprep.mubr.bf16.mxu0 0
    %245 = vmatmul.mubr.bf16.gmra.mxu0 %v71
    %v246 = vpop.f32.mrf.mxu0
    %v247 = vadd.f32 0.0, %v246
    %v248 = vpop.f32.mrf.mxu0
    %v249 = vadd.f32 0.0, %v248
    %v250 = vpop.f32.mrf.mxu0
    %v251 = vadd.f32 0.0, %v250
    %v252 = vpop.f32.mrf.mxu0
    %v253 = vadd.f32 0.0, %v252
    %254 = vdwg.mxu0
    %255 = vmatprep.subr.bf16.mxu0 0
    %256 = vmatpush1.bf16.msra.mxu0 %v177
    %257 = vmatprep.subr.bf16.mxu0 0
    %258 = vmatpush1.bf16.msra.mxu0 %v174
    %259 = vmatprep.subr.bf16.mxu0 0
    %260 = vmatpush1.bf16.msra.mxu0 %v171
    %261 = vmatprep.subr.bf16.mxu0 0
    %262 = vmatpush1.bf16.msra.mxu0 %v168
    %263 = vmatprep.subr.bf16.mxu0 0
    %264 = vmatpush1.bf16.msra.mxu0 %v165
    %265 = vmatprep.subr.bf16.mxu0 0
    %266 = vmatpush1.bf16.msra.mxu0 %v162
    %267 = vmatprep.subr.bf16.mxu0 0
    %268 = vmatpush1.bf16.msra.mxu0 %v159
    %269 = vmatprep.subr.bf16.mxu0 0
    %270 = vmatpush1.bf16.msra.mxu0 %v156
    %271 = vmatprep.subr.bf16.mxu0 0
    %272 = vmatpush2.bf16.msra.mxu0 0
    %273 = vmatprep.subr.bf16.mxu0 0
    %274 = vmatpush2.bf16.msra.mxu0 0
    %275 = vmatprep.subr.bf16.mxu0 0
    %276 = vmatpush2.bf16.msra.mxu0 0
    %277 = vmatprep.subr.bf16.mxu0 0
    %278 = vmatpush2.bf16.msra.mxu0 0
    %279 = vmatprep.subr.bf16.mxu0 0
    %280 = vmatpush2.bf16.msra.mxu0 0
    %281 = vmatprep.subr.bf16.mxu0 0
    %282 = vmatpush2.bf16.msra.mxu0 0
    %283 = vmatprep.subr.bf16.mxu0 0
    %284 = vmatpush2.bf16.msra.mxu0 0
    %285 = vmatprep.subr.bf16.mxu0 0
    %286 = vmatpush2.bf16.msra.mxu0 0
    %287 = vmatprep.mubr.bf16.mxu0 0
    %288 = vmatmul.mubr.bf16.gmra.mxu0 %v70
    %v289 = vpop.f32.mrf.mxu0
    %v290 = vadd.f32 0.0, %v289
    %v291 = vpop.f32.mrf.mxu0
    %v292 = vpop.f32.mrf.mxu0
    %v293 = vadd.f32 0.0, %v292
    %v294 = vpop.f32.mrf.mxu0
    %295 = vmatprep.mubr.bf16.mxu0 0
    %296 = vmatmul.mubr.bf16.gmra.mxu0 %v71
    %v297 = vpop.f32.mrf.mxu0
    %v298 = vadd.f32 0.0, %v297
    %v299 = vpop.f32.mrf.mxu0
    %v300 = vpop.f32.mrf.mxu0
    %v301 = vadd.f32 0.0, %v300
    %v302 = vpop.f32.mrf.mxu0
    %303 = vdwg.mxu0
    %v304 = vpack.c.bf16 %v241, %v237
    %v305 = vpack.c.bf16 %v243, %v239
    %v306 = vpack.c.bf16 %v293, %v290
    %v307 = vpack.c.bf16 %v251, %v247
    %v308 = vpack.c.bf16 %v253, %v249
    %v309 = vpack.c.bf16 %v301, %v298
    %v316 = vunpack.c.l.b16 %v304
    %v317 = vunpack.c.l.b16 %v305
    %v318 = vunpack.c.l.b16 %v306
    %v319 = vunpack.c.h.b16 %v304
    %v320 = vunpack.c.h.b16 %v305
    %v321 = vunpack.c.h.b16 %v306
    %v322 = vunpack.c.l.b16 %v307
    %v323 = vunpack.c.l.b16 %v308
    %v324 = vunpack.c.l.b16 %v309
    %v325 = vunpack.c.h.b16 %v307
    %v326 = vunpack.c.h.b16 %v308
    %v327 = vunpack.c.h.b16 %v309
    %v328 = vpack.c.b16 %v317, %v316
    %v329 = vpack.c.b16 %v318, %v318
    %v330 = vpack.c.b16 %v320, %v319
    %v331 = vpack.c.b16 %v321, %v321
    %v332 = vpack.c.b16 %v323, %v322
    %v333 = vpack.c.b16 %v324, %v324
    %v334 = vpack.c.b16 %v326, %v325
    %v335 = vpack.c.b16 %v327, %v327
    %344 = vst [vmem:[%s2] sm:$0xff] %v328
    %345 = vst [vmem:[%s2 + $0x8] sm:$0xf] %v329
    %346 = vst [vmem:[%s2 + $0xc] sm:$0xff] %v330
    %347 = vst [vmem:[%s2 + $0x14] sm:$0xf] %v331
    %348 = vst [vmem:[%s2 + $0x18] sm:$0xff] %v332
    %349 = vst [vmem:[%s2 + $0x20] sm:$0xf] %v333
    %350 = vst [vmem:[%s2 + $0x24] sm:$0xff] %v334
    %351 = vst [vmem:[%s2 + $0x2c] sm:$0xf] %v335
    // Predicated region
    $region14: #{alibi_attention_forward.3} parent=1 // pred_check
      _
    $region15: #{alibi_attention_forward.3} parent=1 // pred_check_branch
      %353 = sbr.rel (0) target = $region17
    $region16: #{alibi_attention_forward.3} parent=1 // pred_region
      _
    $region17: #{alibi_attention_forward.3} parent=1 // pred_fallthru
      _
    // Predicated region
    $region18: #{alibi_attention_forward.3} parent=1 // pred_check
      _
    $region19: #{alibi_attention_forward.3} parent=1 // pred_check_branch
      %355 = sbr.rel (0) target = $region21
    $region20: #{alibi_attention_forward.3} parent=1 // pred_region
      _
    $region21: #{alibi_attention_forward.3} parent=1 // pred_fallthru
      _
    %356 = vsyncpa [#allocation3], 1

// kernel: alibi_attention_forward.4
$region0: #{alibi_attention_forward.4}
  #allocation0 [shape = 'u32[]', space=smem, size = 0x4, offset = 0x4, fixed_abs, tag = 'smem constant byte address 0x4 - core index']
  #allocation1 [shape = 'u32[144,128]{1,0:T(1,128)}', space=vmem, size = 0x12000, scoped, tag = 'internal scratch']
  %s0 = inlined_call_operand.vmem [shape: bf16[2,16,384], index: 0, kind: input, shape index: {}, may-alias: {0,1,2}]
  %s1 = inlined_call_operand.vmem [shape: bf16[2,16,384], index: 1, kind: input, shape index: {}, may-alias: {0,1,2}]
  %s2 = inlined_call_operand.vmem [shape: bf16[2,16,384], index: 2, kind: input, shape index: {}, may-alias: {0,1,2}]
  %s3 = inlined_call_operand.vmem [shape: bf16[2,16,128], index: 3, kind: output, shape index: {}]
  %s4 = sld [smem:[#allocation0]]
  $region168: #{alibi_attention_forward.4} parent=0
    _
  %s6 = ssub.s32 1, %s4
  %s7 = scalar_select 0, %s6, %s4
  $region1: #{alibi_attention_forward.4} parent=0
    #allocation2 [shape = 'u8[8192]{0}', space=vmem, size = 0x2000, scoped, tag = 'input window, operand 0']
    #allocation3 [shape = 'u8[8192]{0}', space=vmem, size = 0x2000, scoped, tag = 'input window, operand 1']
    #allocation4 [shape = 'u8[8192]{0}', space=vmem, size = 0x2000, scoped, tag = 'input window, operand 2']
    loop: start=0, step=1, limit=4
    $region2: #{alibi_attention_forward.4} parent=1 // loop_pre_header
      _
    $region3: #{alibi_attention_forward.4} parent=1 // loop_header
      %s9 = sphi 0, %s13
      %p10 = scmp.ge.s32.totalorder %s9, 4
      %s16 = sphi 0, %s35
      %s17 = sphi 0, %s31
      %s18 = sphi 0, %s27
      %s19 = sphi 0, %s16
      %s20 = sphi 0, %s17
      %s21 = sphi 0, %s18
      %s22 = sphi 0, %s19
      %s23 = sphi 0, %s20
      %s24 = sphi 0, %s21
      %s42 = sphi 0, %s44
      %s45 = sphi 0, %s42
      %s46 = sphi 0, %s45
      %s62 = sphi 0, %s46
      %s72 = sphi 0, %s74
      %s75 = sphi 0, %s72
      %s76 = sphi 0, %s75
      %s92 = sphi 0, %s76
      %s102 = sphi 0, %s104
      %s105 = sphi 0, %s102
      %s106 = sphi 0, %s105
      %s122 = sphi 0, %s106
      %s132 = sphi 0, %s134
      %s135 = sphi 0, %s132
      %s136 = sphi 0, %s135
      %s152 = sphi 0, %s136
    $region4: #{alibi_attention_forward.4} parent=1 // loop_header_branch
      %12 = sbr.rel (%p10) target = $region8
    $region5: #{alibi_attention_forward.4} parent=1 // loop_body
      %s14 = ssub.s32 %s9, 1
      %s15 = ssub.s32 %s9, 2
      %s25 = sadd.s32 1, %s18
      %p26 = scmp.ge.s32.totalorder %s25, 1
      %s27 = scalar_select %p26, 0, %s25
      %s28 = sadd.s32 1, %s17
      %s29 = scalar_select %p26, %s28, %s17
      %p30 = scmp.ge.s32.totalorder %s29, 1
      %s31 = scalar_select %p30, 0, %s29
      %s32 = sadd.s32 1, %s16
      %s33 = scalar_select %p30, %s32, %s16
      %p34 = scmp.ge.s32.totalorder %s33, 2
      %s35 = scalar_select %p34, 0, %s33
      %s36 = ssub.s32 %s16, %s35
      %s37 = ssub.s32 %s18, %s27
      %s38 = sor.u32 %s36, %s37
      %s39 = ssub.s32 %s17, %s31
      %s40 = sor.u32 %s38, %s39
      %p41 = scmp.eq.s32.totalorder %s40, 0
      %s43 = sadd.s32 %s42, 1
      %s44 = scalar_select %p41, %s42, %s43
      %p47 = pneg %p41
      %p48 = scmp.eq.s32.totalorder %s9, 1
      %p49 = por %p47, %p48
      %p50 = scmp.ne.s32.totalorder %s42, %s45
      %p51 = scmp.eq.s32.totalorder %s9, 0
      %p52 = por %p50, %p51
      %p53 = scmp.ne.s32.totalorder %s42, %s45
      %p54 = scmp.eq.s32.totalorder %s14, 1
      %p55 = por %p53, %p54
      %p56 = scmp.ne.s32.totalorder %s45, %s46
      %p57 = scmp.eq.s32.totalorder %s14, 0
      %p58 = por %p56, %p57
      %p59 = scmp.ne.s32.totalorder %s45, %s46
      %p60 = scmp.eq.s32.totalorder %s15, 1
      %p61 = por %p59, %p60
      %p63 = scmp.ne.s32.totalorder %s46, %s62
      %p64 = scmp.eq.s32.totalorder %s15, 0
      %p65 = por %p63, %p64
      %s66 = sadd.s32 %s17, 1
      %s67 = sadd.s32 %s31, 1
      %s68 = ssub.s32 %s16, %s35
      %s69 = ssub.s32 %s66, %s67
      %s70 = sor.u32 %s68, %s69
      %p71 = scmp.eq.s32.totalorder %s70, 0
      %s73 = sadd.s32 %s72, 1
      %s74 = scalar_select %p71, %s72, %s73
      %p77 = pneg %p71
      %p78 = scmp.eq.s32.totalorder %s9, 1
      %p79 = por %p77, %p78
      %p80 = scmp.ne.s32.totalorder %s72, %s75
      %p81 = scmp.eq.s32.totalorder %s9, 0
      %p82 = por %p80, %p81
      %p83 = scmp.ne.s32.totalorder %s72, %s75
      %p84 = scmp.eq.s32.totalorder %s14, 1
      %p85 = por %p83, %p84
      %p86 = scmp.ne.s32.totalorder %s75, %s76
      %p87 = scmp.eq.s32.totalorder %s14, 0
      %p88 = por %p86, %p87
      %p89 = scmp.ne.s32.totalorder %s75, %s76
      %p90 = scmp.eq.s32.totalorder %s15, 1
      %p91 = por %p89, %p90
      %p93 = scmp.ne.s32.totalorder %s76, %s92
      %p94 = scmp.eq.s32.totalorder %s15, 0
      %p95 = por %p93, %p94
      %s96 = sadd.s32 %s17, 2
      %s97 = sadd.s32 %s31, 2
      %s98 = ssub.s32 %s16, %s35
      %s99 = ssub.s32 %s96, %s97
      %s100 = sor.u32 %s98, %s99
      %p101 = scmp.eq.s32.totalorder %s100, 0
      %s103 = sadd.s32 %s102, 1
      %s104 = scalar_select %p101, %s102, %s103
      %p107 = pneg %p101
      %p108 = scmp.eq.s32.totalorder %s9, 1
      %p109 = por %p107, %p108
      %p110 = scmp.ne.s32.totalorder %s102, %s105
      %p111 = scmp.eq.s32.totalorder %s9, 0
      %p112 = por %p110, %p111
      %p113 = scmp.ne.s32.totalorder %s102, %s105
      %p114 = scmp.eq.s32.totalorder %s14, 1
      %p115 = por %p113, %p114
      %p116 = scmp.ne.s32.totalorder %s105, %s106
      %p117 = scmp.eq.s32.totalorder %s14, 0
      %p118 = por %p116, %p117
      %p119 = scmp.ne.s32.totalorder %s105, %s106
      %p120 = scmp.eq.s32.totalorder %s15, 1
      %p121 = por %p119, %p120
      %p123 = scmp.ne.s32.totalorder %s106, %s122
      %p124 = scmp.eq.s32.totalorder %s15, 0
      %p125 = por %p123, %p124
      %s126 = ssub.s32 %s16, %s35
      %s127 = ssub.s32 %s18, %s27
      %s128 = sor.u32 %s126, %s127
      %s129 = ssub.s32 %s17, %s31
      %s130 = sor.u32 %s128, %s129
      %p131 = scmp.eq.s32.totalorder %s130, 0
      %s133 = sadd.s32 %s132, 1
      %s134 = scalar_select %p131, %s132, %s133
      %p137 = pneg %p131
      %p138 = scmp.eq.s32.totalorder %s9, 1
      %p139 = por %p137, %p138
      %p140 = scmp.ne.s32.totalorder %s132, %s135
      %p141 = scmp.eq.s32.totalorder %s9, 0
      %p142 = por %p140, %p141
      %p143 = scmp.ne.s32.totalorder %s132, %s135
      %p144 = scmp.eq.s32.totalorder %s14, 1
      %p145 = por %p143, %p144
      %p146 = scmp.ne.s32.totalorder %s135, %s136
      %p147 = scmp.eq.s32.totalorder %s14, 0
      %p148 = por %p146, %p147
      %p149 = scmp.ne.s32.totalorder %s135, %s136
      %p150 = scmp.eq.s32.totalorder %s15, 1
      %p151 = por %p149, %p150
      %p153 = scmp.ne.s32.totalorder %s136, %s152
      %p154 = scmp.eq.s32.totalorder %s15, 0
      %p155 = por %p153, %p154
      %p156 = scmp.le.s32.totalorder 1, %s9
      %p157 = scmp.lt.s32.totalorder %s9, 3
      %p158 = pnand %p156, %p157
      %p159 = pneg %p158
      // Predicated region
      $region9: #{alibi_attention_forward.4} parent=5 // pred_check
        _
      $region10: #{alibi_attention_forward.4} parent=5 // pred_check_branch
        %161 = sbr.rel (%p158) target = $region12
      $region11: #{alibi_attention_forward.4} parent=5 // pred_region
        %s162 = ssub.s32 %s9, 1
      $region12: #{alibi_attention_forward.4} parent=5 // pred_fallthru
        _
      %p163 = scmp.lt.s32.totalorder %s9, 2
      // Predicated region
      $region13: #{alibi_attention_forward.4} parent=5 // pred_check
        %p164 = pneg %p163
      $region14: #{alibi_attention_forward.4} parent=5 // pred_check_branch
        %166 = sbr.rel (%p164) target = $region16
      $region15: #{alibi_attention_forward.4} parent=5 // pred_region
        // Predicated region
        $region17: #{alibi_attention_forward.4} parent=15 // pred_check
          %p167 = pneg %p52
        $region18: #{alibi_attention_forward.4} parent=15 // pred_check_branch
          %169 = sbr.rel (%p167) target = $region20
        $region19: #{alibi_attention_forward.4} parent=15 // pred_region
          %s170 = sand.u32 %s42, 1
          %s171 = sand.u32 %s42, 1
          %s172 = smul.addr %s171, 8
          %s173 = scalar_lea.vmem [#allocation2], %s172
          %s174 = smul.u32 2, %s18
          %s175 = smul.addr %s174, 3
          %s176 = sadd.s32 %s17, %s175
          %s177 = smul.addr %s16, 6
          %s178 = sadd.s32 %s176, %s177
          %s179 = smul.addr %s178, 4
          %s180 = scalar_lea.vmem %s0, %s179
          // Predicated region
          $region21: #{alibi_attention_forward.4} parent=19 // pred_check
            _
          $region22: #{alibi_attention_forward.4} parent=19 // pred_check_branch
            %182 = sbr.rel (0) target = $region24
          $region23: #{alibi_attention_forward.4} parent=19 // pred_region
            // Predicated region
            $region25: #{alibi_attention_forward.4} parent=23 // pred_check
              _
            $region26: #{alibi_attention_forward.4} parent=23 // pred_check_branch
              %184 = sbr.rel target = $region28
            $region27: #{alibi_attention_forward.4} parent=23 // pred_region
              // Predicated region
              $region40: #{alibi_attention_forward.4} parent=27 // pred_check
                _
              $region41: #{alibi_attention_forward.4} parent=27 // pred_check_branch
                %202 = sbr.rel (0) target = $region43
              $region42: #{alibi_attention_forward.4} parent=27 // pred_region
                loop: start=0, step=1, limit=1
                $region44: #{alibi_attention_forward.4} parent=42 // loop_pre_header
                  _
                $region45: #{alibi_attention_forward.4} parent=42 // loop_header
                  %s204 = sphi 0, %s208
                  %p205 = scmp.ge.s32.totalorder %s204, 1
                  %s209 = sphi %s180, %s180
                  %s210 = sphi %s173, %s173
                $region46: #{alibi_attention_forward.4} parent=42 // loop_header_branch
                  %207 = sbr.rel (%p205) target = $region50
                $region47: #{alibi_attention_forward.4} parent=42 // loop_body
                  _
                $region48: #{alibi_attention_forward.4} parent=42 // loop_footer
                  %s208 = sadd.s32 1, %s204
                $region49: #{alibi_attention_forward.4} parent=42 // loop_footer_branch
                  %203 = sbr.rel target = $region45
                $region50: #{alibi_attention_forward.4} parent=42 // loop_exit
                  _
                %s212 = ssub.s32 16, 1
                loop: start=0, step=1, limit=1
                $region51: #{alibi_attention_forward.4} parent=42 // loop_pre_header
                  _
                $region52: #{alibi_attention_forward.4} parent=42 // loop_header
                  %s214 = sphi 0, %s218
                  %p215 = scmp.ge.s32.totalorder %s214, 1
                  %s219 = sphi %s180, %s180
                  %s220 = sphi %s173, %s173
                $region53: #{alibi_attention_forward.4} parent=42 // loop_header_branch
                  %217 = sbr.rel (%p215) target = $region57
                $region54: #{alibi_attention_forward.4} parent=42 // loop_body
                  %v221 = vld [vmem:[%s219] sm:%s212]
                  %222 = vst [vmem:[%s220] sm:%s212] %v221
                  %v223 = vld [vmem:[%s219 + $0xc] sm:%s212]
                  %224 = vst [vmem:[%s220 + $0x4] sm:%s212] %v223
                $region55: #{alibi_attention_forward.4} parent=42 // loop_footer
                  %s218 = sadd.s32 1, %s214
                $region56: #{alibi_attention_forward.4} parent=42 // loop_footer_branch
                  %213 = sbr.rel target = $region52
                $region57: #{alibi_attention_forward.4} parent=42 // loop_exit
                  _
              $region43: #{alibi_attention_forward.4} parent=27 // pred_fallthru
                _
            $region28: #{alibi_attention_forward.4} parent=23 // pred_fallthru
              _
            // Predicated region
            $region29: #{alibi_attention_forward.4} parent=23 // pred_check
              _
            $region30: #{alibi_attention_forward.4} parent=23 // pred_check_branch
              %186 = sbr.rel (0) target = $region32
            $region31: #{alibi_attention_forward.4} parent=23 // pred_region
              %s188 = ssub.s32 16, 1
              loop: start=0, step=1, limit=1
              $region33: #{alibi_attention_forward.4} parent=31 // loop_pre_header
                _
              $region34: #{alibi_attention_forward.4} parent=31 // loop_header
                %s190 = sphi 0, %s194
                %p191 = scmp.ge.s32.totalorder %s190, 1
                %s195 = sphi %s180, %s180
                %s196 = sphi %s173, %s173
              $region35: #{alibi_attention_forward.4} parent=31 // loop_header_branch
                %193 = sbr.rel (%p191) target = $region39
              $region36: #{alibi_attention_forward.4} parent=31 // loop_body
                %v197 = vld [vmem:[%s195] sm:%s188]
                %198 = vst [vmem:[%s196] sm:%s188] %v197
                %v199 = vld [vmem:[%s195 + $0xc] sm:%s188]
                %200 = vst [vmem:[%s196 + $0x4] sm:%s188] %v199
              $region37: #{alibi_attention_forward.4} parent=31 // loop_footer
                %s194 = sadd.s32 1, %s190
              $region38: #{alibi_attention_forward.4} parent=31 // loop_footer_branch
                %189 = sbr.rel target = $region34
              $region39: #{alibi_attention_forward.4} parent=31 // loop_exit
                _
            $region32: #{alibi_attention_forward.4} parent=23 // pred_fallthru
              _
          $region24: #{alibi_attention_forward.4} parent=19 // pred_fallthru
            _
          %225 = vnop
        $region20: #{alibi_attention_forward.4} parent=15 // pred_fallthru
          _
        // Predicated region
        $region58: #{alibi_attention_forward.4} parent=15 // pred_check
          %p226 = pneg %p82
        $region59: #{alibi_attention_forward.4} parent=15 // pred_check_branch
          %228 = sbr.rel (%p226) target = $region61
        $region60: #{alibi_attention_forward.4} parent=15 // pred_region
          %s229 = sand.u32 %s72, 1
          %s230 = sand.u32 %s72, 1
          %s231 = smul.addr %s230, 8
          %s232 = scalar_lea.vmem [#allocation3], %s231
          %s233 = sadd.s32 %s17, 1
          %s234 = smul.addr %s16, 6
          %s235 = sadd.s32 %s233, %s234
          %s236 = smul.addr %s235, 4
          %s237 = scalar_lea.vmem %s1, %s236
          // Predicated region
          $region62: #{alibi_attention_forward.4} parent=60 // pred_check
            _
          $region63: #{alibi_attention_forward.4} parent=60 // pred_check_branch
            %239 = sbr.rel (0) target = $region65
          $region64: #{alibi_attention_forward.4} parent=60 // pred_region
            // Predicated region
            $region66: #{alibi_attention_forward.4} parent=64 // pred_check
              _
            $region67: #{alibi_attention_forward.4} parent=64 // pred_check_branch
              %241 = sbr.rel target = $region69
            $region68: #{alibi_attention_forward.4} parent=64 // pred_region
              // Predicated region
              $region81: #{alibi_attention_forward.4} parent=68 // pred_check
                _
              $region82: #{alibi_attention_forward.4} parent=68 // pred_check_branch
                %259 = sbr.rel (0) target = $region84
              $region83: #{alibi_attention_forward.4} parent=68 // pred_region
                loop: start=0, step=1, limit=1
                $region85: #{alibi_attention_forward.4} parent=83 // loop_pre_header
                  _
                $region86: #{alibi_attention_forward.4} parent=83 // loop_header
                  %s261 = sphi 0, %s265
                  %p262 = scmp.ge.s32.totalorder %s261, 1
                  %s266 = sphi %s237, %s237
                  %s267 = sphi %s232, %s232
                $region87: #{alibi_attention_forward.4} parent=83 // loop_header_branch
                  %264 = sbr.rel (%p262) target = $region91
                $region88: #{alibi_attention_forward.4} parent=83 // loop_body
                  _
                $region89: #{alibi_attention_forward.4} parent=83 // loop_footer
                  %s265 = sadd.s32 1, %s261
                $region90: #{alibi_attention_forward.4} parent=83 // loop_footer_branch
                  %260 = sbr.rel target = $region86
                $region91: #{alibi_attention_forward.4} parent=83 // loop_exit
                  _
                %s269 = ssub.s32 16, 1
                loop: start=0, step=1, limit=1
                $region92: #{alibi_attention_forward.4} parent=83 // loop_pre_header
                  _
                $region93: #{alibi_attention_forward.4} parent=83 // loop_header
                  %s271 = sphi 0, %s275
                  %p272 = scmp.ge.s32.totalorder %s271, 1
                  %s276 = sphi %s237, %s237
                  %s277 = sphi %s232, %s232
                $region94: #{alibi_attention_forward.4} parent=83 // loop_header_branch
                  %274 = sbr.rel (%p272) target = $region98
                $region95: #{alibi_attention_forward.4} parent=83 // loop_body
                  %v278 = vld [vmem:[%s276] sm:%s269]
                  %279 = vst [vmem:[%s277] sm:%s269] %v278
                  %v280 = vld [vmem:[%s276 + $0xc] sm:%s269]
                  %281 = vst [vmem:[%s277 + $0x4] sm:%s269] %v280
                $region96: #{alibi_attention_forward.4} parent=83 // loop_footer
                  %s275 = sadd.s32 1, %s271
                $region97: #{alibi_attention_forward.4} parent=83 // loop_footer_branch
                  %270 = sbr.rel target = $region93
                $region98: #{alibi_attention_forward.4} parent=83 // loop_exit
                  _
              $region84: #{alibi_attention_forward.4} parent=68 // pred_fallthru
                _
            $region69: #{alibi_attention_forward.4} parent=64 // pred_fallthru
              _
            // Predicated region
            $region70: #{alibi_attention_forward.4} parent=64 // pred_check
              _
            $region71: #{alibi_attention_forward.4} parent=64 // pred_check_branch
              %243 = sbr.rel (0) target = $region73
            $region72: #{alibi_attention_forward.4} parent=64 // pred_region
              %s245 = ssub.s32 16, 1
              loop: start=0, step=1, limit=1
              $region74: #{alibi_attention_forward.4} parent=72 // loop_pre_header
                _
              $region75: #{alibi_attention_forward.4} parent=72 // loop_header
                %s247 = sphi 0, %s251
                %p248 = scmp.ge.s32.totalorder %s247, 1
                %s252 = sphi %s237, %s237
                %s253 = sphi %s232, %s232
              $region76: #{alibi_attention_forward.4} parent=72 // loop_header_branch
                %250 = sbr.rel (%p248) target = $region80
              $region77: #{alibi_attention_forward.4} parent=72 // loop_body
                %v254 = vld [vmem:[%s252] sm:%s245]
                %255 = vst [vmem:[%s253] sm:%s245] %v254
                %v256 = vld [vmem:[%s252 + $0xc] sm:%s245]
                %257 = vst [vmem:[%s253 + $0x4] sm:%s245] %v256
              $region78: #{alibi_attention_forward.4} parent=72 // loop_footer
                %s251 = sadd.s32 1, %s247
              $region79: #{alibi_attention_forward.4} parent=72 // loop_footer_branch
                %246 = sbr.rel target = $region75
              $region80: #{alibi_attention_forward.4} parent=72 // loop_exit
                _
            $region73: #{alibi_attention_forward.4} parent=64 // pred_fallthru
              _
          $region65: #{alibi_attention_forward.4} parent=60 // pred_fallthru
            _
          %282 = vnop
        $region61: #{alibi_attention_forward.4} parent=15 // pred_fallthru
          _
        // Predicated region
        $region99: #{alibi_attention_forward.4} parent=15 // pred_check
          %p283 = pneg %p112
        $region100: #{alibi_attention_forward.4} parent=15 // pred_check_branch
          %285 = sbr.rel (%p283) target = $region102
        $region101: #{alibi_attention_forward.4} parent=15 // pred_region
          %s286 = sand.u32 %s102, 1
          %s287 = sand.u32 %s102, 1
          %s288 = smul.addr %s287, 8
          %s289 = scalar_lea.vmem [#allocation4], %s288
          %s290 = sadd.s32 %s17, 2
          %s291 = smul.addr %s16, 6
          %s292 = sadd.s32 %s290, %s291
          %s293 = smul.addr %s292, 4
          %s294 = scalar_lea.vmem %s2, %s293
          // Predicated region
          $region103: #{alibi_attention_forward.4} parent=101 // pred_check
            _
          $region104: #{alibi_attention_forward.4} parent=101 // pred_check_branch
            %296 = sbr.rel (0) target = $region106
          $region105: #{alibi_attention_forward.4} parent=101 // pred_region
            // Predicated region
            $region107: #{alibi_attention_forward.4} parent=105 // pred_check
              _
            $region108: #{alibi_attention_forward.4} parent=105 // pred_check_branch
              %298 = sbr.rel target = $region110
            $region109: #{alibi_attention_forward.4} parent=105 // pred_region
              // Predicated region
              $region122: #{alibi_attention_forward.4} parent=109 // pred_check
                _
              $region123: #{alibi_attention_forward.4} parent=109 // pred_check_branch
                %316 = sbr.rel (0) target = $region125
              $region124: #{alibi_attention_forward.4} parent=109 // pred_region
                loop: start=0, step=1, limit=1
                $region126: #{alibi_attention_forward.4} parent=124 // loop_pre_header
                  _
                $region127: #{alibi_attention_forward.4} parent=124 // loop_header
                  %s318 = sphi 0, %s322
                  %p319 = scmp.ge.s32.totalorder %s318, 1
                  %s323 = sphi %s294, %s294
                  %s324 = sphi %s289, %s289
                $region128: #{alibi_attention_forward.4} parent=124 // loop_header_branch
                  %321 = sbr.rel (%p319) target = $region132
                $region129: #{alibi_attention_forward.4} parent=124 // loop_body
                  _
                $region130: #{alibi_attention_forward.4} parent=124 // loop_footer
                  %s322 = sadd.s32 1, %s318
                $region131: #{alibi_attention_forward.4} parent=124 // loop_footer_branch
                  %317 = sbr.rel target = $region127
                $region132: #{alibi_attention_forward.4} parent=124 // loop_exit
                  _
                %s326 = ssub.s32 16, 1
                loop: start=0, step=1, limit=1
                $region133: #{alibi_attention_forward.4} parent=124 // loop_pre_header
                  _
                $region134: #{alibi_attention_forward.4} parent=124 // loop_header
                  %s328 = sphi 0, %s332
                  %p329 = scmp.ge.s32.totalorder %s328, 1
                  %s333 = sphi %s294, %s294
                  %s334 = sphi %s289, %s289
                $region135: #{alibi_attention_forward.4} parent=124 // loop_header_branch
                  %331 = sbr.rel (%p329) target = $region139
                $region136: #{alibi_attention_forward.4} parent=124 // loop_body
                  %v335 = vld [vmem:[%s333] sm:%s326]
                  %336 = vst [vmem:[%s334] sm:%s326] %v335
                  %v337 = vld [vmem:[%s333 + $0xc] sm:%s326]
                  %338 = vst [vmem:[%s334 + $0x4] sm:%s326] %v337
                $region137: #{alibi_attention_forward.4} parent=124 // loop_footer
                  %s332 = sadd.s32 1, %s328
                $region138: #{alibi_attention_forward.4} parent=124 // loop_footer_branch
                  %327 = sbr.rel target = $region134
                $region139: #{alibi_attention_forward.4} parent=124 // loop_exit
                  _
              $region125: #{alibi_attention_forward.4} parent=109 // pred_fallthru
                _
            $region110: #{alibi_attention_forward.4} parent=105 // pred_fallthru
              _
            // Predicated region
            $region111: #{alibi_attention_forward.4} parent=105 // pred_check
              _
            $region112: #{alibi_attention_forward.4} parent=105 // pred_check_branch
              %300 = sbr.rel (0) target = $region114
            $region113: #{alibi_attention_forward.4} parent=105 // pred_region
              %s302 = ssub.s32 16, 1
              loop: start=0, step=1, limit=1
              $region115: #{alibi_attention_forward.4} parent=113 // loop_pre_header
                _
              $region116: #{alibi_attention_forward.4} parent=113 // loop_header
                %s304 = sphi 0, %s308
                %p305 = scmp.ge.s32.totalorder %s304, 1
                %s309 = sphi %s294, %s294
                %s310 = sphi %s289, %s289
              $region117: #{alibi_attention_forward.4} parent=113 // loop_header_branch
                %307 = sbr.rel (%p305) target = $region121
              $region118: #{alibi_attention_forward.4} parent=113 // loop_body
                %v311 = vld [vmem:[%s309] sm:%s302]
                %312 = vst [vmem:[%s310] sm:%s302] %v311
                %v313 = vld [vmem:[%s309 + $0xc] sm:%s302]
                %314 = vst [vmem:[%s310 + $0x4] sm:%s302] %v313
              $region119: #{alibi_attention_forward.4} parent=113 // loop_footer
                %s308 = sadd.s32 1, %s304
              $region120: #{alibi_attention_forward.4} parent=113 // loop_footer_branch
                %303 = sbr.rel target = $region116
              $region121: #{alibi_attention_forward.4} parent=113 // loop_exit
                _
            $region114: #{alibi_attention_forward.4} parent=105 // pred_fallthru
              _
          $region106: #{alibi_attention_forward.4} parent=101 // pred_fallthru
            _
          %339 = vnop
        $region102: #{alibi_attention_forward.4} parent=15 // pred_fallthru
          _
      $region16: #{alibi_attention_forward.4} parent=5 // pred_fallthru
        _
      %p340 = scmp.le.s32.totalorder 1, %s9
      %p341 = scmp.lt.s32.totalorder %s9, 3
      %p342 = pnand %p340, %p341
      %p343 = pneg %p342
      // Predicated region
      $region140: #{alibi_attention_forward.4} parent=5 // pred_check
        _
      $region141: #{alibi_attention_forward.4} parent=5 // pred_check_branch
        %345 = sbr.rel (%p342) target = $region143
      $region142: #{alibi_attention_forward.4} parent=5 // pred_region
        %s346 = ssub.s32 %s9, 1
        %s347 = sand.u32 %s45, 1
        %s348 = sand.u32 %s45, 1
        %s349 = smul.addr %s348, 8
        %s350 = scalar_lea.vmem [#allocation2], %s349
        // Predicated region
        $region144: #{alibi_attention_forward.4} parent=142 // pred_check
          %p351 = pneg %p58
        $region145: #{alibi_attention_forward.4} parent=142 // pred_check_branch
          %353 = sbr.rel (%p351) target = $region147
        $region146: #{alibi_attention_forward.4} parent=142 // pred_region
          _
        $region147: #{alibi_attention_forward.4} parent=142 // pred_fallthru
          _
        %s354 = sand.u32 %s75, 1
        %s355 = sand.u32 %s75, 1
        %s356 = smul.addr %s355, 8
        %s357 = scalar_lea.vmem [#allocation3], %s356
        // Predicated region
        $region148: #{alibi_attention_forward.4} parent=142 // pred_check
          %p358 = pneg %p88
        $region149: #{alibi_attention_forward.4} parent=142 // pred_check_branch
          %360 = sbr.rel (%p358) target = $region151
        $region150: #{alibi_attention_forward.4} parent=142 // pred_region
          _
        $region151: #{alibi_attention_forward.4} parent=142 // pred_fallthru
          _
        %s361 = sand.u32 %s105, 1
        %s362 = sand.u32 %s105, 1
        %s363 = smul.addr %s362, 8
        %s364 = scalar_lea.vmem [#allocation4], %s363
        // Predicated region
        $region152: #{alibi_attention_forward.4} parent=142 // pred_check
          %p365 = pneg %p118
        $region153: #{alibi_attention_forward.4} parent=142 // pred_check_branch
          %367 = sbr.rel (%p365) target = $region155
        $region154: #{alibi_attention_forward.4} parent=142 // pred_region
          _
        $region155: #{alibi_attention_forward.4} parent=142 // pred_fallthru
          _
        %s368 = sand.u32 %s45, 1
        %s369 = sand.u32 %s45, 1
        %s370 = smul.addr %s369, 8
        %s371 = scalar_lea.vmem [#allocation2], %s370
        %p372 = pneg %p58
        %p373 = pneg %p55
        %s374 = sand.u32 %s75, 1
        %s375 = sand.u32 %s75, 1
        %s376 = smul.addr %s375, 8
        %s377 = scalar_lea.vmem [#allocation3], %s376
        %p378 = pneg %p88
        %p379 = pneg %p85
        %s380 = sand.u32 %s105, 1
        %s381 = sand.u32 %s105, 1
        %s382 = smul.addr %s381, 8
        %s383 = scalar_lea.vmem [#allocation4], %s382
        %p384 = pneg %p118
        %p385 = pneg %p115
        %p386 = pneg %p148
        %p387 = pneg %p145
        %s388 = smul.u32 2, %s21
        %p389 = scmp.lt.s32.totalorder %s19, 1
        %s390 = scalar_select %p389, %s19, 1
        %p391 = scmp.lt.s32.totalorder %s388, 1
        %s392 = scalar_select %p391, %s388, 1
        %p393 = scmp.lt.s32.totalorder %s20, 0
        %s394 = scalar_select %p393, %s20, 0
        %s395 = sadd.s32 %s394, %s392
        %s396 = smul.addr %s390, 2
        %s397 = sadd.s32 %s395, %s396
        %s398 = smul.addr %s397, 4
        %s399 = scalar_lea.vmem %s3, %s398
        %s400 = smul.u32 2, %s21
        %s401 = sadd.s32 %s20, 1
        %s402 = sadd.s32 %s20, 2
        %s403 = smul.u32 2, %s21
        %p404 = scmp.lt.s32.totalorder %s19, 1
        %s405 = scalar_select %p404, %s19, 1
        %p406 = scmp.lt.s32.totalorder %s403, 1
        %s407 = scalar_select %p406, %s403, 1
        %p408 = scmp.lt.s32.totalorder %s20, 0
        %s409 = scalar_select %p408, %s20, 0
        %s410 = sadd.s32 %s409, %s407
        %s411 = smul.addr %s405, 2
        %s412 = sadd.s32 %s410, %s411
        %s413 = smul.addr %s412, 4
        %s414 = scalar_lea.vmem %s3, %s413
        %s415 = smul.u32 2, %s21
        %s418 = smul.u32 %s21, 16
        %v419 = vlaneseq
        %v420 = vshrl.u32 %v419, 7
        %v421 = vadd.s32 %v420, 8
        %v422 = vstv %s418
        %v423 = vadd.s32 %v422, %v420
        %v424 = vadd.s32 %v422, %v421
        %v425 = vlaneseq
        %v426 = vand.u32 %v425, 127
        %vm427 = vcmp.le.s32.totalorder %v426, %v423
        %vm428 = vcmp.le.s32.totalorder %v426, %v424
        %v429 = vld [vmem:[%s350] sm:$0xf]
        %v430 = vld [vmem:[%s350 + $0x4] sm:$0xf]
        %v431 = vmul.bf16 %v429, 1043676725
        %v432 = vmul.bf16 %v430, 1043676725
        %v433 = vld [vmem:[%s357] sm:$0xf]
        %v434 = vld [vmem:[%s357 + $0x4] sm:$0xf]
        %v435 = vld [vmem:[%s364] sm:$0xf]
        %v436 = vld [vmem:[%s364 + $0x4] sm:$0xf]
        %v439 = vunpack.c.l.b16 %v431
        %v440 = vunpack.c.l.b16 %v432
        %v441 = vpack.c.b16 %v440, %v439
        %v444 = vunpack.c.l.b16 %v433
        %v445 = vunpack.c.l.b16 %v434
        %v446 = vpack.c.b16 %v445, %v444
        %vm447 = vcmask 261120
        %v449 = vsel %vm447, %v441, 0
        %v452 = vsel %vm447, %v446, 0
        %454 = vmatprep.subr.bf16.mxu0 0
        %455 = vmatpush1.bf16.xpose.msra.mxu0 0
        %456 = vmatprep.subr.bf16.mxu0 0
        %457 = vmatpush1.bf16.xpose.msra.mxu0 0
        %458 = vmatprep.subr.bf16.mxu0 0
        %459 = vmatpush1.bf16.xpose.msra.mxu0 0
        %460 = vmatprep.subr.bf16.mxu0 0
        %461 = vmatpush1.bf16.xpose.msra.mxu0 0
        %462 = vmatprep.subr.bf16.mxu0 0
        %463 = vmatpush1.bf16.xpose.msra.mxu0 0
        %464 = vmatprep.subr.bf16.mxu0 0
        %465 = vmatpush1.bf16.xpose.msra.mxu0 0
        %466 = vmatprep.subr.bf16.mxu0 0
        %467 = vmatpush1.bf16.xpose.msra.mxu0 0
        %468 = vmatprep.subr.bf16.mxu0 0
        %469 = vmatpush1.bf16.xpose.msra.mxu0 %v452
        %470 = vmatprep.subr.bf16.mxu0 0
        %471 = vmatpush2.bf16.xpose.msra.mxu0 0
        %472 = vmatprep.subr.bf16.mxu0 0
        %473 = vmatpush2.bf16.xpose.msra.mxu0 0
        %474 = vmatprep.subr.bf16.mxu0 0
        %475 = vmatpush2.bf16.xpose.msra.mxu0 0
        %476 = vmatprep.subr.bf16.mxu0 0
        %477 = vmatpush2.bf16.xpose.msra.mxu0 0
        %478 = vmatprep.subr.bf16.mxu0 0
        %479 = vmatpush2.bf16.xpose.msra.mxu0 0
        %480 = vmatprep.subr.bf16.mxu0 0
        %481 = vmatpush2.bf16.xpose.msra.mxu0 0
        %482 = vmatprep.subr.bf16.mxu0 0
        %483 = vmatpush2.bf16.xpose.msra.mxu0 0
        %484 = vmatprep.subr.bf16.mxu0 0
        %485 = vmatpush2.bf16.xpose.msra.mxu0 0
        %486 = vmatprep.mubr.bf16.mxu0 0
        %487 = vmatmul.mubr.bf16.gmra.mxu0 %v449
        %v488 = vpop.f32.mrf.mxu0
        %v489 = vadd.f32 0.0, %v488
        %v490 = vpop.f32.mrf.mxu0
        %v491 = vpop.f32.mrf.mxu0
        %v492 = vadd.f32 0.0, %v491
        %v493 = vpop.f32.mrf.mxu0
        %494 = vdwg.mxu0
        %v495 = vsel %vm427, %v489, -inf
        %v496 = vsel %vm428, %v492, -inf
        %vm497 = vcmask 130048
        %v498 = vsel %vm497, %v495, -inf
        %499 = vmax.xlane.f32.xlu0 %v498
        %v500 = vpop.xlane.xlu0 %499
        %v501 = vsel %vm497, %v496, -inf
        %502 = vmax.xlane.f32.xlu0 %v501
        %v503 = vpop.xlane.xlu0 %502
        %v504 = vsub.f32 %v495, %v500
        %v505 = vsub.f32 %v496, %v503
        %v506 = vmul.f32 %v504, 1.442695
        %v507 = vpow.pop %v506
        %v508 = vmul.f32 %v505, 1.442695
        %v509 = vpow.pop %v508
        %v510 = vsel %vm497, %v507, 0.0
        %511 = vadd.xlane.f32.xlu0 %v510
        %v512 = vpop.xlane.xlu0 %511
        %v513 = vsel %vm497, %v509, 0.0
        %514 = vadd.xlane.f32.xlu0 %v513
        %v515 = vpop.xlane.xlu0 %514
        %v516 = vpack.c.bf16 %v509, %v507
        %v519 = vunpack.c.l.b16 %v435
        %v520 = vunpack.c.l.b16 %v436
        %v521 = vpack.c.b16 %v520, %v519
        %v524 = vsel %vm497, %v516, 0
        %526 = vmatprep.subr.bf16.mxu0 0
        %527 = vmatpush1.bf16.msra.mxu0 0
        %528 = vmatprep.subr.bf16.mxu0 0
        %529 = vmatpush1.bf16.msra.mxu0 0
        %530 = vmatprep.subr.bf16.mxu0 0
        %531 = vmatpush1.bf16.msra.mxu0 0
        %532 = vmatprep.subr.bf16.mxu0 0
        %533 = vmatpush1.bf16.msra.mxu0 0
        %534 = vmatprep.subr.bf16.mxu0 0
        %535 = vmatpush1.bf16.msra.mxu0 0
        %536 = vmatprep.subr.bf16.mxu0 0
        %537 = vmatpush1.bf16.msra.mxu0 0
        %538 = vmatprep.subr.bf16.mxu0 0
        %539 = vmatpush1.bf16.msra.mxu0 0
        %540 = vmatprep.subr.bf16.mxu0 0
        %541 = vmatpush1.bf16.msra.mxu0 %v521
        %542 = vmatprep.subr.bf16.mxu0 0
        %543 = vmatpush2.bf16.msra.mxu0 0
        %544 = vmatprep.subr.bf16.mxu0 0
        %545 = vmatpush2.bf16.msra.mxu0 0
        %546 = vmatprep.subr.bf16.mxu0 0
        %547 = vmatpush2.bf16.msra.mxu0 0
        %548 = vmatprep.subr.bf16.mxu0 0
        %549 = vmatpush2.bf16.msra.mxu0 0
        %550 = vmatprep.subr.bf16.mxu0 0
        %551 = vmatpush2.bf16.msra.mxu0 0
        %552 = vmatprep.subr.bf16.mxu0 0
        %553 = vmatpush2.bf16.msra.mxu0 0
        %554 = vmatprep.subr.bf16.mxu0 0
        %555 = vmatpush2.bf16.msra.mxu0 0
        %556 = vmatprep.subr.bf16.mxu0 0
        %557 = vmatpush2.bf16.msra.mxu0 0
        %558 = vmatprep.mubr.bf16.mxu0 0
        %559 = vmatmul.mubr.bf16.gmra.mxu0 %v524
        %v560 = vpop.f32.mrf.mxu0
        %v561 = vadd.f32 0.0, %v560
        %v562 = vpop.f32.mrf.mxu0
        %v563 = vpop.f32.mrf.mxu0
        %v564 = vadd.f32 0.0, %v563
        %v565 = vpop.f32.mrf.mxu0
        %566 = vdwg.mxu0
        %v567 = vrcp.pop %v512
        %v568 = vrcp.pop %v515
        %v569 = vmul.f32 %v561, %v567
        %v570 = vmul.f32 %v564, %v568
        %571 = vrot.lane.b32.xlu0 %v441, 96
        %v572 = vpop.permute.xlu0 %571
        %573 = vrot.lane.b32.xlu0 %v446, 96
        %v574 = vpop.permute.xlu0 %573
        %v576 = vsel %vm447, %v572, 0
        %v579 = vsel %vm447, %v574, 0
        %581 = vmatprep.subr.bf16.mxu0 0
        %582 = vmatpush1.bf16.xpose.msra.mxu0 0
        %583 = vmatprep.subr.bf16.mxu0 0
        %584 = vmatpush1.bf16.xpose.msra.mxu0 0
        %585 = vmatprep.subr.bf16.mxu0 0
        %586 = vmatpush1.bf16.xpose.msra.mxu0 0
        %587 = vmatprep.subr.bf16.mxu0 0
        %588 = vmatpush1.bf16.xpose.msra.mxu0 0
        %589 = vmatprep.subr.bf16.mxu0 0
        %590 = vmatpush1.bf16.xpose.msra.mxu0 0
        %591 = vmatprep.subr.bf16.mxu0 0
        %592 = vmatpush1.bf16.xpose.msra.mxu0 0
        %593 = vmatprep.subr.bf16.mxu0 0
        %594 = vmatpush1.bf16.xpose.msra.mxu0 0
        %595 = vmatprep.subr.bf16.mxu0 0
        %596 = vmatpush1.bf16.xpose.msra.mxu0 %v579
        %597 = vmatprep.subr.bf16.mxu0 0
        %598 = vmatpush2.bf16.xpose.msra.mxu0 0
        %599 = vmatprep.subr.bf16.mxu0 0
        %600 = vmatpush2.bf16.xpose.msra.mxu0 0
        %601 = vmatprep.subr.bf16.mxu0 0
        %602 = vmatpush2.bf16.xpose.msra.mxu0 0
        %603 = vmatprep.subr.bf16.mxu0 0
        %604 = vmatpush2.bf16.xpose.msra.mxu0 0
        %605 = vmatprep.subr.bf16.mxu0 0
        %606 = vmatpush2.bf16.xpose.msra.mxu0 0
        %607 = vmatprep.subr.bf16.mxu0 0
        %608 = vmatpush2.bf16.xpose.msra.mxu0 0
        %609 = vmatprep.subr.bf16.mxu0 0
        %610 = vmatpush2.bf16.xpose.msra.mxu0 0
        %611 = vmatprep.subr.bf16.mxu0 0
        %612 = vmatpush2.bf16.xpose.msra.mxu0 0
        %613 = vmatprep.mubr.bf16.mxu0 0
        %614 = vmatmul.mubr.bf16.gmra.mxu0 %v576
        %v615 = vpop.f32.mrf.mxu0
        %v616 = vadd.f32 0.0, %v615
        %v617 = vpop.f32.mrf.mxu0
        %v618 = vpop.f32.mrf.mxu0
        %v619 = vadd.f32 0.0, %v618
        %v620 = vpop.f32.mrf.mxu0
        %621 = vdwg.mxu0
        %v622 = vsel %vm427, %v616, -inf
        %v623 = vsel %vm428, %v619, -inf
        %v624 = vsel %vm497, %v622, -inf
        %625 = vmax.xlane.f32.xlu0 %v624
        %v626 = vpop.xlane.xlu0 %625
        %v627 = vsel %vm497, %v623, -inf
        %628 = vmax.xlane.f32.xlu0 %v627
        %v629 = vpop.xlane.xlu0 %628
        %v630 = vsub.f32 %v622, %v626
        %v631 = vsub.f32 %v623, %v629
        %v632 = vmul.f32 %v630, 1.442695
        %v633 = vpow.pop %v632
        %v634 = vmul.f32 %v631, 1.442695
        %v635 = vpow.pop %v634
        %v636 = vsel %vm497, %v633, 0.0
        %637 = vadd.xlane.f32.xlu0 %v636
        %v638 = vpop.xlane.xlu0 %637
        %v639 = vsel %vm497, %v635, 0.0
        %640 = vadd.xlane.f32.xlu0 %v639
        %v641 = vpop.xlane.xlu0 %640
        %v642 = vpack.c.bf16 %v635, %v633
        %643 = vrot.lane.b32.xlu0 %v521, 96
        %v644 = vpop.permute.xlu0 %643
        %v647 = vsel %vm497, %v642, 0
        %649 = vmatprep.subr.bf16.mxu0 0
        %650 = vmatpush1.bf16.msra.mxu0 0
        %651 = vmatprep.subr.bf16.mxu0 0
        %652 = vmatpush1.bf16.msra.mxu0 0
        %653 = vmatprep.subr.bf16.mxu0 0
        %654 = vmatpush1.bf16.msra.mxu0 0
        %655 = vmatprep.subr.bf16.mxu0 0
        %656 = vmatpush1.bf16.msra.mxu0 0
        %657 = vmatprep.subr.bf16.mxu0 0
        %658 = vmatpush1.bf16.msra.mxu0 0
        %659 = vmatprep.subr.bf16.mxu0 0
        %660 = vmatpush1.bf16.msra.mxu0 0
        %661 = vmatprep.subr.bf16.mxu0 0
        %662 = vmatpush1.bf16.msra.mxu0 0
        %663 = vmatprep.subr.bf16.mxu0 0
        %664 = vmatpush1.bf16.msra.mxu0 %v644
        %665 = vmatprep.subr.bf16.mxu0 0
        %666 = vmatpush2.bf16.msra.mxu0 0
        %667 = vmatprep.subr.bf16.mxu0 0
        %668 = vmatpush2.bf16.msra.mxu0 0
        %669 = vmatprep.subr.bf16.mxu0 0
        %670 = vmatpush2.bf16.msra.mxu0 0
        %671 = vmatprep.subr.bf16.mxu0 0
        %672 = vmatpush2.bf16.msra.mxu0 0
        %673 = vmatprep.subr.bf16.mxu0 0
        %674 = vmatpush2.bf16.msra.mxu0 0
        %675 = vmatprep.subr.bf16.mxu0 0
        %676 = vmatpush2.bf16.msra.mxu0 0
        %677 = vmatprep.subr.bf16.mxu0 0
        %678 = vmatpush2.bf16.msra.mxu0 0
        %679 = vmatprep.subr.bf16.mxu0 0
        %680 = vmatpush2.bf16.msra.mxu0 0
        %681 = vmatprep.mubr.bf16.mxu0 0
        %682 = vmatmul.mubr.bf16.gmra.mxu0 %v647
        %v683 = vpop.f32.mrf.mxu0
        %v684 = vadd.f32 0.0, %v683
        %v685 = vpop.f32.mrf.mxu0
        %v686 = vpop.f32.mrf.mxu0
        %v687 = vadd.f32 0.0, %v686
        %v688 = vpop.f32.mrf.mxu0
        %689 = vdwg.mxu0
        %v690 = vrcp.pop %v638
        %v691 = vrcp.pop %v641
        %v692 = vmul.f32 %v684, %v690
        %v693 = vmul.f32 %v687, %v691
        %694 = vrot.lane.b32.xlu0 %v441, 64
        %v695 = vpop.permute.xlu0 %694
        %696 = vrot.lane.b32.xlu0 %v446, 64
        %v697 = vpop.permute.xlu0 %696
        %v699 = vsel %vm447, %v695, 0
        %v702 = vsel %vm447, %v697, 0
        %704 = vmatprep.subr.bf16.mxu0 0
        %705 = vmatpush1.bf16.xpose.msra.mxu0 0
        %706 = vmatprep.subr.bf16.mxu0 0
        %707 = vmatpush1.bf16.xpose.msra.mxu0 0
        %708 = vmatprep.subr.bf16.mxu0 0
        %709 = vmatpush1.bf16.xpose.msra.mxu0 0
        %710 = vmatprep.subr.bf16.mxu0 0
        %711 = vmatpush1.bf16.xpose.msra.mxu0 0
        %712 = vmatprep.subr.bf16.mxu0 0
        %713 = vmatpush1.bf16.xpose.msra.mxu0 0
        %714 = vmatprep.subr.bf16.mxu0 0
        %715 = vmatpush1.bf16.xpose.msra.mxu0 0
        %716 = vmatprep.subr.bf16.mxu0 0
        %717 = vmatpush1.bf16.xpose.msra.mxu0 0
        %718 = vmatprep.subr.bf16.mxu0 0
        %719 = vmatpush1.bf16.xpose.msra.mxu0 %v702
        %720 = vmatprep.subr.bf16.mxu0 0
        %721 = vmatpush2.bf16.xpose.msra.mxu0 0
        %722 = vmatprep.subr.bf16.mxu0 0
        %723 = vmatpush2.bf16.xpose.msra.mxu0 0
        %724 = vmatprep.subr.bf16.mxu0 0
        %725 = vmatpush2.bf16.xpose.msra.mxu0 0
        %726 = vmatprep.subr.bf16.mxu0 0
        %727 = vmatpush2.bf16.xpose.msra.mxu0 0
        %728 = vmatprep.subr.bf16.mxu0 0
        %729 = vmatpush2.bf16.xpose.msra.mxu0 0
        %730 = vmatprep.subr.bf16.mxu0 0
        %731 = vmatpush2.bf16.xpose.msra.mxu0 0
        %732 = vmatprep.subr.bf16.mxu0 0
        %733 = vmatpush2.bf16.xpose.msra.mxu0 0
        %734 = vmatprep.subr.bf16.mxu0 0
        %735 = vmatpush2.bf16.xpose.msra.mxu0 0
        %736 = vmatprep.mubr.bf16.mxu0 0
        %737 = vmatmul.mubr.bf16.gmra.mxu0 %v699
        %v738 = vpop.f32.mrf.mxu0
        %v739 = vadd.f32 0.0, %v738
        %v740 = vpop.f32.mrf.mxu0
        %v741 = vpop.f32.mrf.mxu0
        %v742 = vadd.f32 0.0, %v741
        %v743 = vpop.f32.mrf.mxu0
        %744 = vdwg.mxu0
        %v745 = vsel %vm427, %v739, -inf
        %v746 = vsel %vm428, %v742, -inf
        %v747 = vsel %vm497, %v745, -inf
        %748 = vmax.xlane.f32.xlu0 %v747
        %v749 = vpop.xlane.xlu0 %748
        %v750 = vsel %vm497, %v746, -inf
        %751 = vmax.xlane.f32.xlu0 %v750
        %v752 = vpop.xlane.xlu0 %751
        %v753 = vsub.f32 %v745, %v749
        %v754 = vsub.f32 %v746, %v752
        %v755 = vmul.f32 %v753, 1.442695
        %v756 = vpow.pop %v755
        %v757 = vmul.f32 %v754, 1.442695
        %v758 = vpow.pop %v757
        %v759 = vsel %vm497, %v756, 0.0
        %760 = vadd.xlane.f32.xlu0 %v759
        %v761 = vpop.xlane.xlu0 %760
        %v762 = vsel %vm497, %v758, 0.0
        %763 = vadd.xlane.f32.xlu0 %v762
        %v764 = vpop.xlane.xlu0 %763
        %v765 = vpack.c.bf16 %v758, %v756
        %766 = vrot.lane.b32.xlu0 %v521, 64
        %v767 = vpop.permute.xlu0 %766
        %v770 = vsel %vm497, %v765, 0
        %772 = vmatprep.subr.bf16.mxu0 0
        %773 = vmatpush1.bf16.msra.mxu0 0
        %774 = vmatprep.subr.bf16.mxu0 0
        %775 = vmatpush1.bf16.msra.mxu0 0
        %776 = vmatprep.subr.bf16.mxu0 0
        %777 = vmatpush1.bf16.msra.mxu0 0
        %778 = vmatprep.subr.bf16.mxu0 0
        %779 = vmatpush1.bf16.msra.mxu0 0
        %780 = vmatprep.subr.bf16.mxu0 0
        %781 = vmatpush1.bf16.msra.mxu0 0
        %782 = vmatprep.subr.bf16.mxu0 0
        %783 = vmatpush1.bf16.msra.mxu0 0
        %784 = vmatprep.subr.bf16.mxu0 0
        %785 = vmatpush1.bf16.msra.mxu0 0
        %786 = vmatprep.subr.bf16.mxu0 0
        %787 = vmatpush1.bf16.msra.mxu0 %v767
        %788 = vmatprep.subr.bf16.mxu0 0
        %789 = vmatpush2.bf16.msra.mxu0 0
        %790 = vmatprep.subr.bf16.mxu0 0
        %791 = vmatpush2.bf16.msra.mxu0 0
        %792 = vmatprep.subr.bf16.mxu0 0
        %793 = vmatpush2.bf16.msra.mxu0 0
        %794 = vmatprep.subr.bf16.mxu0 0
        %795 = vmatpush2.bf16.msra.mxu0 0
        %796 = vmatprep.subr.bf16.mxu0 0
        %797 = vmatpush2.bf16.msra.mxu0 0
        %798 = vmatprep.subr.bf16.mxu0 0
        %799 = vmatpush2.bf16.msra.mxu0 0
        %800 = vmatprep.subr.bf16.mxu0 0
        %801 = vmatpush2.bf16.msra.mxu0 0
        %802 = vmatprep.subr.bf16.mxu0 0
        %803 = vmatpush2.bf16.msra.mxu0 0
        %804 = vmatprep.mubr.bf16.mxu0 0
        %805 = vmatmul.mubr.bf16.gmra.mxu0 %v770
        %v806 = vpop.f32.mrf.mxu0
        %v807 = vadd.f32 0.0, %v806
        %v808 = vpop.f32.mrf.mxu0
        %v809 = vpop.f32.mrf.mxu0
        %v810 = vadd.f32 0.0, %v809
        %v811 = vpop.f32.mrf.mxu0
        %812 = vdwg.mxu0
        %v813 = vrcp.pop %v761
        %v814 = vrcp.pop %v764
        %v815 = vmul.f32 %v807, %v813
        %v816 = vmul.f32 %v810, %v814
        %817 = vrot.lane.b32.xlu0 %v441, 32
        %v818 = vpop.permute.xlu0 %817
        %819 = vrot.lane.b32.xlu0 %v446, 32
        %v820 = vpop.permute.xlu0 %819
        %v822 = vsel %vm447, %v818, 0
        %v825 = vsel %vm447, %v820, 0
        %827 = vmatprep.subr.bf16.mxu0 0
        %828 = vmatpush1.bf16.xpose.msra.mxu0 0
        %829 = vmatprep.subr.bf16.mxu0 0
        %830 = vmatpush1.bf16.xpose.msra.mxu0 0
        %831 = vmatprep.subr.bf16.mxu0 0
        %832 = vmatpush1.bf16.xpose.msra.mxu0 0
        %833 = vmatprep.subr.bf16.mxu0 0
        %834 = vmatpush1.bf16.xpose.msra.mxu0 0
        %835 = vmatprep.subr.bf16.mxu0 0
        %836 = vmatpush1.bf16.xpose.msra.mxu0 0
        %837 = vmatprep.subr.bf16.mxu0 0
        %838 = vmatpush1.bf16.xpose.msra.mxu0 0
        %839 = vmatprep.subr.bf16.mxu0 0
        %840 = vmatpush1.bf16.xpose.msra.mxu0 0
        %841 = vmatprep.subr.bf16.mxu0 0
        %842 = vmatpush1.bf16.xpose.msra.mxu0 %v825
        %843 = vmatprep.subr.bf16.mxu0 0
        %844 = vmatpush2.bf16.xpose.msra.mxu0 0
        %845 = vmatprep.subr.bf16.mxu0 0
        %846 = vmatpush2.bf16.xpose.msra.mxu0 0
        %847 = vmatprep.subr.bf16.mxu0 0
        %848 = vmatpush2.bf16.xpose.msra.mxu0 0
        %849 = vmatprep.subr.bf16.mxu0 0
        %850 = vmatpush2.bf16.xpose.msra.mxu0 0
        %851 = vmatprep.subr.bf16.mxu0 0
        %852 = vmatpush2.bf16.xpose.msra.mxu0 0
        %853 = vmatprep.subr.bf16.mxu0 0
        %854 = vmatpush2.bf16.xpose.msra.mxu0 0
        %855 = vmatprep.subr.bf16.mxu0 0
        %856 = vmatpush2.bf16.xpose.msra.mxu0 0
        %857 = vmatprep.subr.bf16.mxu0 0
        %858 = vmatpush2.bf16.xpose.msra.mxu0 0
        %859 = vmatprep.mubr.bf16.mxu0 0
        %860 = vmatmul.mubr.bf16.gmra.mxu0 %v822
        %v861 = vpop.f32.mrf.mxu0
        %v862 = vadd.f32 0.0, %v861
        %v863 = vpop.f32.mrf.mxu0
        %v864 = vpop.f32.mrf.mxu0
        %v865 = vadd.f32 0.0, %v864
        %v866 = vpop.f32.mrf.mxu0
        %867 = vdwg.mxu0
        %v868 = vsel %vm427, %v862, -inf
        %v869 = vsel %vm428, %v865, -inf
        %v870 = vsel %vm497, %v868, -inf
        %871 = vmax.xlane.f32.xlu0 %v870
        %v872 = vpop.xlane.xlu0 %871
        %v873 = vsel %vm497, %v869, -inf
        %874 = vmax.xlane.f32.xlu0 %v873
        %v875 = vpop.xlane.xlu0 %874
        %v876 = vsub.f32 %v868, %v872
        %v877 = vsub.f32 %v869, %v875
        %v878 = vmul.f32 %v876, 1.442695
        %v879 = vpow.pop %v878
        %v880 = vmul.f32 %v877, 1.442695
        %v881 = vpow.pop %v880
        %v882 = vsel %vm497, %v879, 0.0
        %883 = vadd.xlane.f32.xlu0 %v882
        %v884 = vpop.xlane.xlu0 %883
        %v885 = vsel %vm497, %v881, 0.0
        %886 = vadd.xlane.f32.xlu0 %v885
        %v887 = vpop.xlane.xlu0 %886
        %v888 = vpack.c.bf16 %v881, %v879
        %889 = vrot.lane.b32.xlu0 %v521, 32
        %v890 = vpop.permute.xlu0 %889
        %v893 = vsel %vm497, %v888, 0
        %895 = vmatprep.subr.bf16.mxu0 0
        %896 = vmatpush1.bf16.msra.mxu0 0
        %897 = vmatprep.subr.bf16.mxu0 0
        %898 = vmatpush1.bf16.msra.mxu0 0
        %899 = vmatprep.subr.bf16.mxu0 0
        %900 = vmatpush1.bf16.msra.mxu0 0
        %901 = vmatprep.subr.bf16.mxu0 0
        %902 = vmatpush1.bf16.msra.mxu0 0
        %903 = vmatprep.subr.bf16.mxu0 0
        %904 = vmatpush1.bf16.msra.mxu0 0
        %905 = vmatprep.subr.bf16.mxu0 0
        %906 = vmatpush1.bf16.msra.mxu0 0
        %907 = vmatprep.subr.bf16.mxu0 0
        %908 = vmatpush1.bf16.msra.mxu0 0
        %909 = vmatprep.subr.bf16.mxu0 0
        %910 = vmatpush1.bf16.msra.mxu0 %v890
        %911 = vmatprep.subr.bf16.mxu0 0
        %912 = vmatpush2.bf16.msra.mxu0 0
        %913 = vmatprep.subr.bf16.mxu0 0
        %914 = vmatpush2.bf16.msra.mxu0 0
        %915 = vmatprep.subr.bf16.mxu0 0
        %916 = vmatpush2.bf16.msra.mxu0 0
        %917 = vmatprep.subr.bf16.mxu0 0
        %918 = vmatpush2.bf16.msra.mxu0 0
        %919 = vmatprep.subr.bf16.mxu0 0
        %920 = vmatpush2.bf16.msra.mxu0 0
        %921 = vmatprep.subr.bf16.mxu0 0
        %922 = vmatpush2.bf16.msra.mxu0 0
        %923 = vmatprep.subr.bf16.mxu0 0
        %924 = vmatpush2.bf16.msra.mxu0 0
        %925 = vmatprep.subr.bf16.mxu0 0
        %926 = vmatpush2.bf16.msra.mxu0 0
        %927 = vmatprep.mubr.bf16.mxu0 0
        %928 = vmatmul.mubr.bf16.gmra.mxu0 %v893
        %v929 = vpop.f32.mrf.mxu0
        %v930 = vadd.f32 0.0, %v929
        %v931 = vpop.f32.mrf.mxu0
        %v932 = vpop.f32.mrf.mxu0
        %v933 = vadd.f32 0.0, %v932
        %v934 = vpop.f32.mrf.mxu0
        %935 = vdwg.mxu0
        %v936 = vrcp.pop %v884
        %v937 = vrcp.pop %v887
        %v938 = vmul.f32 %v930, %v936
        %v939 = vmul.f32 %v933, %v937
        %942 = vrot.lane.b32.xlu0 %v692, 32
        %v943 = vpop.permute.xlu0 %942
        %944 = vrot.lane.b32.xlu0 %v693, 32
        %v945 = vpop.permute.xlu0 %944
        %950 = vrot.lane.b32.xlu0 %v815, 64
        %v951 = vpop.permute.xlu0 %950
        %952 = vrot.lane.b32.xlu0 %v816, 64
        %v953 = vpop.permute.xlu0 %952
        %958 = vrot.lane.b32.xlu0 %v938, 96
        %v959 = vpop.permute.xlu0 %958
        %960 = vrot.lane.b32.xlu0 %v939, 96
        %v961 = vpop.permute.xlu0 %960
        %v964 = vsel %vm447, %v569, %v943
        %v965 = vsel %vm447, %v570, %v945
        %vm966 = vcmask 523264
        %v967 = vsel %vm966, %v964, %v951
        %v968 = vsel %vm966, %v965, %v953
        %vm969 = vcmask 785408
        %v970 = vsel %vm969, %v967, %v959
        %v971 = vsel %vm969, %v968, %v961
        %v972 = vpack.c.bf16 %v971, %v970
        %v974 = vunpack.c.l.b16 %v972
        %v975 = vunpack.c.h.b16 %v972
        %v976 = vpack.c.b16 %v974, %v974
        %v977 = vpack.c.b16 %v975, %v975
        %980 = vst [vmem:[%s414] sm:$0xf] %v976
        %981 = vst [vmem:[%s414 + $0x4] sm:$0xf] %v977
        %s982 = smul.u32 2, %s21
        %p983 = scmp.lt.s32.totalorder %s19, 1
        %s984 = scalar_select %p983, %s19, 1
        %p985 = scmp.lt.s32.totalorder %s982, 1
        %s986 = scalar_select %p985, %s982, 1
        %p987 = scmp.lt.s32.totalorder %s20, 0
        %s988 = scalar_select %p987, %s20, 0
        %s989 = sadd.s32 %s988, %s986
        %s990 = smul.addr %s984, 2
        %s991 = sadd.s32 %s989, %s990
        %s992 = smul.addr %s991, 4
        %s993 = scalar_lea.vmem %s3, %s992
        // Predicated region
        $region156: #{alibi_attention_forward.4} parent=142 // pred_check
          %p994 = pneg %p145
        $region157: #{alibi_attention_forward.4} parent=142 // pred_check_branch
          %996 = sbr.rel (%p994) target = $region159
        $region158: #{alibi_attention_forward.4} parent=142 // pred_region
          %s997 = smul.u32 2, %s21
        $region159: #{alibi_attention_forward.4} parent=142 // pred_fallthru
          _
      $region143: #{alibi_attention_forward.4} parent=5 // pred_fallthru
        _
      %p998 = scmp.le.s32.totalorder 2, %s9
      // Predicated region
      $region160: #{alibi_attention_forward.4} parent=5 // pred_check
        %p999 = pneg %p998
      $region161: #{alibi_attention_forward.4} parent=5 // pred_check_branch
        %1001 = sbr.rel (%p999) target = $region163
      $region162: #{alibi_attention_forward.4} parent=5 // pred_region
        %s1002 = ssub.s32 %s9, 2
        // Predicated region
        $region164: #{alibi_attention_forward.4} parent=162 // pred_check
          %p1003 = pneg %p151
        $region165: #{alibi_attention_forward.4} parent=162 // pred_check_branch
          %1005 = sbr.rel (%p1003) target = $region167
        $region166: #{alibi_attention_forward.4} parent=162 // pred_region
          %s1006 = smul.u32 2, %s24
          %p1007 = scmp.lt.s32.totalorder %s22, 1
          %s1008 = scalar_select %p1007, %s22, 1
          %p1009 = scmp.lt.s32.totalorder %s1006, 1
          %s1010 = scalar_select %p1009, %s1006, 1
          %p1011 = scmp.lt.s32.totalorder %s23, 0
          %s1012 = scalar_select %p1011, %s23, 0
          %s1013 = sadd.s32 %s1012, %s1010
          %s1014 = smul.addr %s1008, 2
          %s1015 = sadd.s32 %s1013, %s1014
          %s1016 = smul.addr %s1015, 4
          %s1017 = scalar_lea.vmem %s3, %s1016
        $region167: #{alibi_attention_forward.4} parent=162 // pred_fallthru
          _
      $region163: #{alibi_attention_forward.4} parent=5 // pred_fallthru
        _
    $region6: #{alibi_attention_forward.4} parent=1 // loop_footer
      %s13 = sadd.s32 1, %s9
    $region7: #{alibi_attention_forward.4} parent=1 // loop_footer_branch
      %8 = sbr.rel target = $region3
    $region8: #{alibi_attention_forward.4} parent=1 // loop_exit
      _

</llo_original>
